<compile_context>
chip_gen: v6e
topology: v6e:2x2x1
jax: 0.10.0
libtpu: 0.0.40
codegen_flags: <defaults>
</compile_context>

<pallas_src>
import functools

import jax
import jax.numpy as jnp
from jax.experimental import pallas as pl
from jax.experimental.pallas import tpu as pltpu


def _silu(x):
    return x * jax.nn.sigmoid(x)


def _cct_kernel(N, c, num_heads, key_dim, head_dim, BB, W,
                x_ref,
                wcv1, bcv1, wqkv, bqkv,
                pemw, bpe, wproj, bproj,
                wf1, bf1, wf2, bf2,
                wcv2, bcv2,
                out_ref):
    M = BB * N
    nh_kd = num_heads * key_dim

    def mm(lhs, w_ref, b_ref=None):
        # bf16 MXU inputs, f32 accumulation.
        out = jnp.dot(lhs.astype(jnp.bfloat16), w_ref[...],
                      preferred_element_type=jnp.float32)
        if b_ref is not None:
            out = out + b_ref[...]
        return out

    x = x_ref[...]                                        # (M, C1) bf16

    # ---- cv1: single fused (C1, 2c) matmul + SiLU, then static lane split ----
    ab = _silu(mm(x, wcv1, bcv1))                         # (M, 2c) f32
    a = ab[:, :c]                                         # (M, c)
    b = ab[:, c:]                                         # (M, c)

    # ---- Attention(b): single fused Q|K|V matmul (scale folded into Q cols) ----
    qkv = mm(b, wqkv, bqkv)                               # (M, 2*nh_kd + c) f32
    q_all = qkv[:, :nh_kd].astype(jnp.bfloat16)
    k_all = qkv[:, nh_kd:2 * nh_kd].astype(jnp.bfloat16)
    v_all = qkv[:, 2 * nh_kd:]                            # (M, c) f32 (pe conv)

    q3 = q_all.reshape(BB, N, nh_kd)                      # free leading-dim split
    k3 = k_all.reshape(BB, N, nh_kd)
    v3 = v_all.astype(jnp.bfloat16).reshape(BB, N, c)

    # TODO(synk): for large H*W, replace this dense (N, N) softmax with a
    # flash-style online softmax over key tiles (m/l/acc running stats).
    head_outs = []
    for h in range(num_heads):                            # nh == 1 in test config
        q_h = q3[:, :, h * key_dim:(h + 1) * key_dim]
        k_h = k3[:, :, h * key_dim:(h + 1) * key_dim]
        v_h = v3[:, :, h * head_dim:(h + 1) * head_dim]
        # s[b, i, j] = sum_d q[b, i, d] * k[b, j, d]  (scale already in q)
        s = jnp.einsum('bqd,bkd->bqk', q_h, k_h,
                       preferred_element_type=jnp.float32)
        s = s - jnp.max(s, axis=-1, keepdims=True)
        p = jnp.exp(s)
        denom = jnp.sum(p, axis=-1, keepdims=True)
        o_h = jnp.einsum('bqk,bkd->bqd', p.astype(jnp.bfloat16), v_h,
                         preferred_element_type=jnp.float32)
        # normalize the (N, hd) output instead of the (N, N) probabilities
        o_h = o_h * pl.reciprocal(denom, approx=True)
        head_outs.append(o_h)
    attn3 = head_outs[0] if num_heads == 1 else jnp.concatenate(head_outs, axis=-1)
    attn_out = attn3.reshape(M, c)

    # ---- depthwise 3x3 positional conv on V ----
    # Rolls wrap across the BB image stack, but the per-image zero-padding
    # boundary masks are pre-folded into pemw[(tap), N, c] and zero those taps.
    pe_acc = v_all.reshape(BB, N, c) * pemw[4]            # center tap (dh=0, dw=0)
    kidx = 0
    for dh in (-1, 0, 1):
        for dw in (-1, 0, 1):
            s = dh * W + dw
            if s != 0:
                shifted = pltpu.roll(v_all, shift=(-s) % M, axis=0)
                pe_acc = pe_acc + shifted.reshape(BB, N, c) * pemw[kidx]
            kidx += 1
    pe_out = pe_acc.reshape(M, c) + bpe[...]

    xa = mm(attn_out + pe_out, wproj, bproj)
    b = b + xa                                            # residual: b + attn(b)

    # ---- FFN: Conv(c, 2c) + SiLU, Conv(2c, c) no act, residual ----
    f = _silu(mm(b, wf1, bf1))
    f = mm(f, wf2, bf2)
    b = b + f

    # ---- cv2: one lane concat then a single K=2c matmul ----
    ab2 = jnp.concatenate([a.astype(jnp.bfloat16), b.astype(jnp.bfloat16)], axis=-1)
    out = _silu(jnp.dot(ab2, wcv2[...], preferred_element_type=jnp.float32)
                + bcv2[...])
    out_ref[...] = out.astype(out_ref.dtype)


_PARAM_ORDER = ('wcv1', 'bcv1', 'wqkv', 'bqkv', 'pemw', 'bpe',
                'wproj', 'bproj', 'wf1', 'bf1', 'wf2', 'bf2',
                'wcv2', 'bcv2')


def _prepare_params(params, *, c, num_heads, key_dim, head_dim, H, W):
    """Re-layout PyTorch-style fused params into kernel-friendly form."""
    bf16 = jnp.bfloat16
    scale = float(key_dim) ** -0.5
    per = 2 * key_dim + head_dim
    wqkv, bqkv = params['wqkv'], params['bqkv']

    def gather_cols(w, off, width):
        cols = [w[:, h * per + off: h * per + off + width] for h in range(num_heads)]
        return cols[0] if num_heads == 1 else jnp.concatenate(cols, axis=1)

    wq = gather_cols(wqkv, 0, key_dim) * scale
    wk = gather_cols(wqkv, key_dim, key_dim)
    wv = gather_cols(wqkv, 2 * key_dim, head_dim)
    bq = gather_cols(bqkv, 0, key_dim) * scale
    bk = gather_cols(bqkv, key_dim, key_dim)
    bv = gather_cols(bqkv, 2 * key_dim, head_dim)

    # single fused Q|K|V weight: [Q(all heads) | K(all heads) | V(all heads)]
    wqkv_f = jnp.concatenate([wq, wk, wv], axis=1).astype(bf16)
    bqkv_f = jnp.concatenate([bq, bk, bv], axis=1)

    # 3x3 depthwise pe conv: fold the compile-time zero-padding boundary masks
    # into per-tap per-channel weights, kept per-image (9, N, c) (NOT BB-tiled).
    N = H * W
    n = jnp.arange(N)
    hh, ww = n // W, n % W
    masks = []
    for dh in (-1, 0, 1):
        for dw in (-1, 0, 1):
            valid = ((hh + dh >= 0) & (hh + dh < H) &
                     (ww + dw >= 0) & (ww + dw < W))
            masks.append(valid.astype(jnp.float32))
    mask = jnp.stack(masks)[:, :, None]                    # (9, N, 1)
    pemw = mask * params['wpe'][:, None, :]                # (9, N, c)

    return dict(
        wcv1=params['wcv1'].astype(bf16), bcv1=params['bcv1'],
        wqkv=wqkv_f, bqkv=bqkv_f,
        pemw=pemw, bpe=params['bpe'],
        wproj=params['wproj'].astype(bf16), bproj=params['bproj'],
        wf1=params['wf1'].astype(bf16), bf1=params['bf1'],
        wf2=params['wf2'].astype(bf16), bf2=params['bf2'],
        wcv2=params['wcv2'].astype(bf16), bcv2=params['bcv2'],
    )


@functools.partial(jax.jit, static_argnames=('num_heads', 'block_batch'))
def cct_forward(x_nchw, params, *, num_heads, block_batch=None):
    B, C1, H, W = x_nchw.shape
    N = H * W
    c = params['wqkv'].shape[0]
    head_dim = c // num_heads
    key_dim = head_dim // 2

    if block_batch is None:
        divisors = [d for d in range(1, B + 1) if B % d == 0]
        # keep >= 2 grid steps when B allows it (v7x has 2 TensorCores and a
        # >=2-step grid also pipelines input DMA), then grow BB toward
        # M = BB*N ~ 256 rows to fill the 256-row MXUs on v6e/v7x.
        cand = [d for d in divisors if B // d >= 2] or divisors
        block_batch = cand[0]
        for d in cand:
            if d * N <= max(256, N):
                block_batch = max(block_batch, d)
    BB = block_batch
    assert B % BB == 0
    M = BB * N

    prep = _prepare_params(params, c=c, num_heads=num_heads, key_dim=key_dim,
                           head_dim=head_dim, H=H, W=W)

    # TODO(synk): accept NHWC at the API boundary (or transpose in-kernel) to
    # avoid these two extra full-tensor HBM passes (matters most on v5e).
    x_2d = jnp.transpose(x_nchw, (0, 2, 3, 1)).reshape(B * N, C1).astype(jnp.bfloat16)

    kern = functools.partial(_cct_kernel, N, c, num_heads, key_dim, head_dim, BB, W)

    def const_spec(shape):
        nd = len(shape)
        return pl.BlockSpec(shape, lambda g, _nd=nd: (0,) * _nd)

    in_specs = [pl.BlockSpec((M, C1), lambda g: (g, 0))]
    args = [x_2d]
    for name in _PARAM_ORDER:
        p = prep[name]
        in_specs.append(const_spec(p.shape))
        args.append(p)

    # generation-aware VMEM budget: ~5/8 of physical, capped at 64 MiB
    # (v7x has only 64 MiB per TensorCore; v5e/v6e have 128 MiB).
    vmem_cap = 128 * 1024 * 1024
    try:
        vmem_cap = int(getattr(pltpu.get_tpu_info(), 'vmem_capacity_bytes', vmem_cap))
    except Exception:
        pass
    vmem_limit = max(32 * 1024 * 1024, min(64 * 1024 * 1024, (vmem_cap * 5) // 8))

    out_2d = pl.pallas_call(
        kern,
        out_shape=jax.ShapeDtypeStruct((B * N, C1), x_nchw.dtype),
        grid=(B // BB,),
        in_specs=in_specs,
        out_specs=pl.BlockSpec((M, C1), lambda g: (g, 0)),
        compiler_params=pltpu.CompilerParams(
            dimension_semantics=("parallel",),
            vmem_limit_bytes=vmem_limit),
    )(*args)

    return out_2d.reshape(B, H, W, C1).transpose(0, 3, 1, 2)


def init_params(key, c1, e=0.5):
    """Deterministic synthetic params; BatchNorm folded into conv weight + bias.

    Layout matches the PyTorch module: wqkv output channels are ordered per-head
    [q(key_dim), k(key_dim), v(head_dim)]; the wrapper re-layouts them.
    """
    c = int(c1 * e)
    num_heads = c // 64
    head_dim = c // num_heads
    key_dim = head_dim // 2
    keys = jax.random.split(key, 8)

    def dense(k, fin, fout, bias_scale=0.02):
        kw, kb = jax.random.split(k)
        w = jax.random.normal(kw, (fin, fout), jnp.float32) / jnp.sqrt(float(fin))
        bias = jax.random.normal(kb, (1, fout), jnp.float32) * bias_scale
        return w, bias

    wcv1, bcv1 = dense(keys[0], c1, 2 * c)
    wqkv, bqkv = dense(keys[1], c, c + 2 * key_dim * num_heads)   # = 2c
    wproj, bproj = dense(keys[2], c, c)
    wf1, bf1 = dense(keys[3], c, 2 * c)
    wf2, bf2 = dense(keys[4], 2 * c, c)
    wcv2, bcv2 = dense(keys[5], 2 * c, c1)
    # depthwise 3x3 pe conv: (9, c) where row k = (kh*3 + kw) tap, per-channel weight
    wpe = jax.random.normal(keys[6], (9, c), jnp.float32) / 3.0
    bpe = jax.random.normal(keys[7], (1, c), jnp.float32) * 0.02

    params = dict(wcv1=wcv1, bcv1=bcv1, wqkv=wqkv, bqkv=bqkv, wpe=wpe, bpe=bpe,
                  wproj=wproj, bproj=bproj, wf1=wf1, bf1=bf1, wf2=wf2, bf2=bf2,
                  wcv2=wcv2, bcv2=bcv2)
    return params, num_heads


def _reference_forward(x, params, num_heads):
    """Pure-JAX f32 reference matching the PyTorch CCT forward."""
    B, C1, H, W = x.shape
    c = params['wqkv'].shape[0]
    hd = c // num_heads
    kd = hd // 2
    per = 2 * kd + hd
    N = H * W

    def conv1x1(t, w, bias, act):
        y = t @ w + bias
        return _silu(y) if act else y

    t = jnp.transpose(x, (0, 2, 3, 1)).reshape(B, N, C1)
    ab = conv1x1(t, params['wcv1'], params['bcv1'], True)
    a, b = ab[..., :c], ab[..., c:]

    qkv = conv1x1(b, params['wqkv'], params['bqkv'], False)
    scale = kd ** -0.5
    heads, v_cols = [], []
    for h in range(num_heads):
        base = h * per
        q = qkv[..., base:base + kd]
        k = qkv[..., base + kd:base + 2 * kd]
        v = qkv[..., base + 2 * kd:base + per]
        attn = jnp.einsum('bnd,bmd->bnm', q, k) * scale
        attn = jax.nn.softmax(attn, axis=-1)
        heads.append(jnp.einsum('bnm,bmd->bnd', attn, v))
        v_cols.append(v)
    attn_out = jnp.concatenate(heads, axis=-1)
    v_all = jnp.concatenate(v_cols, axis=-1)

    v_img = v_all.reshape(B, H, W, c)
    v_pad = jnp.pad(v_img, ((0, 0), (1, 1), (1, 1), (0, 0)))
    pe = jnp.zeros_like(v_img)
    kidx = 0
    for kh in range(3):
        for kw in range(3):
            pe = pe + v_pad[:, kh:kh + H, kw:kw + W, :] * params['wpe'][kidx]
            kidx += 1
    pe = pe.reshape(B, N, c) + params['bpe']

    xa = conv1x1(attn_out + pe, params['wproj'], params['bproj'], False)
    b = b + xa
    f = conv1x1(b, params['wf1'], params['bf1'], True)
    f = conv1x1(f, params['wf2'], params['bf2'], False)
    b = b + f
    out = conv1x1(jnp.concatenate([a, b], axis=-1),
                  params['wcv2'], params['bcv2'], True)
    return out.reshape(B, H, W, C1).transpose(0, 3, 1, 2)


if __name__ == "__main__":
    key = jax.random.PRNGKey(0)
    kx, kp = jax.random.split(key)

    # c1 must satisfy num_heads = (c1*e)//64 >= 1 -> smallest valid c1 = 128
    B, c1, H, W = 2, 128, 8, 8
    x = jax.random.normal(kx, (B, c1, H, W), jnp.float32)
    params, num_heads = init_params(kp, c1, e=0.5)

    out = cct_forward(x, params, num_heads=num_heads)
    out = jax.block_until_ready(out)
    assert out.shape == (B, c1, H, W)
    assert bool(jnp.all(jnp.isfinite(out)))

    # loose-tolerance check vs f32 reference (kernel uses bf16 MXU inputs)
    ref = _reference_forward(x, params, num_heads)
    max_err = float(jnp.max(jnp.abs(out - ref)))
    assert max_err < 0.25, f"max abs error vs reference too large: {max_err}"

    print("KERNEL_OK")
</pallas_src>

<mosaic_0001>
module attributes {stable_mosaic.version = 11 : i64} {
  func.func @_cct_kernel(%arg0: i32, %arg1: memref<64x128xbf16, #tpu.memory_space<vmem>>, %arg2: memref<128x128xbf16, #tpu.memory_space<vmem>>, %arg3: memref<1x128xf32, #tpu.memory_space<vmem>>, %arg4: memref<64x128xbf16, #tpu.memory_space<vmem>>, %arg5: memref<1x128xf32, #tpu.memory_space<vmem>>, %arg6: memref<9x64x64xf32, #tpu.memory_space<vmem>>, %arg7: memref<1x64xf32, #tpu.memory_space<vmem>>, %arg8: memref<64x64xbf16, #tpu.memory_space<vmem>>, %arg9: memref<1x64xf32, #tpu.memory_space<vmem>>, %arg10: memref<64x128xbf16, #tpu.memory_space<vmem>>, %arg11: memref<1x128xf32, #tpu.memory_space<vmem>>, %arg12: memref<128x64xbf16, #tpu.memory_space<vmem>>, %arg13: memref<1x64xf32, #tpu.memory_space<vmem>>, %arg14: memref<128x128xbf16, #tpu.memory_space<vmem>>, %arg15: memref<1x128xf32, #tpu.memory_space<vmem>>, %arg16: memref<64x128xf32, #tpu.memory_space<vmem>>) attributes {dimension_semantics = [#tpu.dimension_semantics<parallel>], iteration_bounds = array<i64: 2>, scalar_prefetch = 0 : i64, scratch_operands = 0 : i64, tpu.core_type = #tpu.core_type<tc>, window_params = [{transform_indices = @transform_0, window_bounds = array<i64: 64, 128>}, {pipeline_mode = #tpu.pipeline_mode<synchronous>, transform_indices = @transform_1, window_bounds = array<i64: 128, 128>}, {pipeline_mode = #tpu.pipeline_mode<synchronous>, transform_indices = @transform_2, window_bounds = array<i64: 1, 128>}, {pipeline_mode = #tpu.pipeline_mode<synchronous>, transform_indices = @transform_3, window_bounds = array<i64: 64, 128>}, {pipeline_mode = #tpu.pipeline_mode<synchronous>, transform_indices = @transform_4, window_bounds = array<i64: 1, 128>}, {pipeline_mode = #tpu.pipeline_mode<synchronous>, transform_indices = @transform_5, window_bounds = array<i64: 9, 64, 64>}, {pipeline_mode = #tpu.pipeline_mode<synchronous>, transform_indices = @transform_6, window_bounds = array<i64: 1, 64>}, {pipeline_mode = #tpu.pipeline_mode<synchronous>, transform_indices = @transform_7, window_bounds = array<i64: 64, 64>}, {pipeline_mode = #tpu.pipeline_mode<synchronous>, transform_indices = @transform_8, window_bounds = array<i64: 1, 64>}, {pipeline_mode = #tpu.pipeline_mode<synchronous>, transform_indices = @transform_9, window_bounds = array<i64: 64, 128>}, {pipeline_mode = #tpu.pipeline_mode<synchronous>, transform_indices = @transform_10, window_bounds = array<i64: 1, 128>}, {pipeline_mode = #tpu.pipeline_mode<synchronous>, transform_indices = @transform_11, window_bounds = array<i64: 128, 64>}, {pipeline_mode = #tpu.pipeline_mode<synchronous>, transform_indices = @transform_12, window_bounds = array<i64: 1, 64>}, {pipeline_mode = #tpu.pipeline_mode<synchronous>, transform_indices = @transform_13, window_bounds = array<i64: 128, 128>}, {pipeline_mode = #tpu.pipeline_mode<synchronous>, transform_indices = @transform_14, window_bounds = array<i64: 1, 128>}, {transform_indices = @transform_15, window_bounds = array<i64: 64, 128>}]} {
    %c0 = arith.constant 0 : index
    %c0_0 = arith.constant 0 : index
    %0 = vector.load %arg1[%c0, %c0_0] : memref<64x128xbf16, #tpu.memory_space<vmem>>, vector<64x128xbf16>
    %c0_1 = arith.constant 0 : index
    %c0_2 = arith.constant 0 : index
    %1 = vector.load %arg2[%c0_1, %c0_2] : memref<128x128xbf16, #tpu.memory_space<vmem>>, vector<128x128xbf16>
    %cst = arith.constant dense<0.000000e+00> : vector<64x128xf32>
    %2 = tpu.matmul %0, %1, %cst {dimension_numbers = #tpu.dot_dimension_numbers<[1], [0], [0], [1], [0, 0, 1, 1], [], []>} : vector<64x128xbf16>, vector<128x128xbf16>, vector<64x128xf32> -> vector<64x128xf32>
    %c0_3 = arith.constant 0 : index
    %c0_4 = arith.constant 0 : index
    %3 = vector.load %arg3[%c0_3, %c0_4] : memref<1x128xf32, #tpu.memory_space<vmem>>, vector<1x128xf32>
    %4 = vector.broadcast %3 : vector<1x128xf32> to vector<64x128xf32>
    %5 = arith.addf %2, %4 : vector<64x128xf32>
    %6 = arith.negf %5 : vector<64x128xf32>
    %7 = math.exp %6 : vector<64x128xf32>
    %cst_5 = arith.constant 1.000000e+00 : f32
    %8 = vector.broadcast %cst_5 : f32 to vector<64x128xf32>
    %9 = arith.addf %8, %7 : vector<64x128xf32>
    %10 = arith.divf %8, %9 : vector<64x128xf32>
    %11 = arith.mulf %5, %10 : vector<64x128xf32>
    %12 = vector.extract_strided_slice %11 {offsets = [0, 0], sizes = [64, 64], strides = [1, 1]} : vector<64x128xf32> to vector<64x64xf32>
    %13 = vector.extract_strided_slice %11 {offsets = [0, 64], sizes = [64, 64], strides = [1, 1]} : vector<64x128xf32> to vector<64x64xf32>
    %14 = arith.truncf %13 : vector<64x64xf32> to vector<64x64xbf16>
    %c0_6 = arith.constant 0 : index
    %c0_7 = arith.constant 0 : index
    %15 = vector.load %arg4[%c0_6, %c0_7] : memref<64x128xbf16, #tpu.memory_space<vmem>>, vector<64x128xbf16>
    %cst_8 = arith.constant dense<0.000000e+00> : vector<64x128xf32>
    %16 = tpu.matmul %14, %15, %cst_8 {dimension_numbers = #tpu.dot_dimension_numbers<[1], [0], [0], [1], [0, 0, 1, 1], [], []>} : vector<64x64xbf16>, vector<64x128xbf16>, vector<64x128xf32> -> vector<64x128xf32>
    %c0_9 = arith.constant 0 : index
    %c0_10 = arith.constant 0 : index
    %17 = vector.load %arg5[%c0_9, %c0_10] : memref<1x128xf32, #tpu.memory_space<vmem>>, vector<1x128xf32>
    %18 = vector.broadcast %17 : vector<1x128xf32> to vector<64x128xf32>
    %19 = arith.addf %16, %18 : vector<64x128xf32>
    %20 = vector.extract_strided_slice %19 {offsets = [0, 0], sizes = [64, 32], strides = [1, 1]} : vector<64x128xf32> to vector<64x32xf32>
    %21 = arith.truncf %20 : vector<64x32xf32> to vector<64x32xbf16>
    %22 = vector.extract_strided_slice %19 {offsets = [0, 32], sizes = [64, 32], strides = [1, 1]} : vector<64x128xf32> to vector<64x32xf32>
    %23 = arith.truncf %22 : vector<64x32xf32> to vector<64x32xbf16>
    %24 = vector.extract_strided_slice %19 {offsets = [0, 64], sizes = [64, 64], strides = [1, 1]} : vector<64x128xf32> to vector<64x64xf32>
    %25 = vector.shape_cast %21 : vector<64x32xbf16> to vector<1x64x32xbf16>
    %26 = vector.shape_cast %23 : vector<64x32xbf16> to vector<1x64x32xbf16>
    %27 = arith.truncf %24 : vector<64x64xf32> to vector<64x64xbf16>
    %28 = vector.shape_cast %27 : vector<64x64xbf16> to vector<1x64x64xbf16>
    "tpu.trace_start"() <{level = 10 : i32, message = "bqd,bkd->bqk"}> : () -> ()
    %cst_11 = arith.constant dense<0.000000e+00> : vector<1x64x64xf32>
    %29 = tpu.matmul %25, %26, %cst_11 {dimension_numbers = #tpu.dot_dimension_numbers<[2], [2], [1], [1], [0, 0, 0, 1, 1, 1], [0], [0]>} : vector<1x64x32xbf16>, vector<1x64x32xbf16>, vector<1x64x64xf32> -> vector<1x64x64xf32>
    "tpu.trace_stop"() : () -> ()
    %cst_12 = arith.constant dense<0xFF800000> : vector<1x64xf32>
    %30 = vector.multi_reduction <maximumf>, %29, %cst_12 [2] : vector<1x64x64xf32> to vector<1x64xf32>
    %31 = vector.shape_cast %30 : vector<1x64xf32> to vector<1x64x1xf32>
    %32 = vector.broadcast %31 : vector<1x64x1xf32> to vector<1x64x64xf32>
    %33 = arith.subf %29, %32 : vector<1x64x64xf32>
    %34 = math.exp %33 : vector<1x64x64xf32>
    %cst_13 = arith.constant dense<0.000000e+00> : vector<1x64xf32>
    %35 = vector.multi_reduction <add>, %34, %cst_13 [2] : vector<1x64x64xf32> to vector<1x64xf32>
    %36 = vector.shape_cast %35 : vector<1x64xf32> to vector<1x64x1xf32>
    %37 = arith.truncf %34 : vector<1x64x64xf32> to vector<1x64x64xbf16>
    "tpu.trace_start"() <{level = 10 : i32, message = "bqk,bkd->bqd"}> : () -> ()
    %cst_14 = arith.constant dense<0.000000e+00> : vector<1x64x64xf32>
    %38 = tpu.matmul %37, %28, %cst_14 {dimension_numbers = #tpu.dot_dimension_numbers<[2], [1], [1], [2], [0, 0, 0, 1, 1, 2], [0], [0]>} : vector<1x64x64xbf16>, vector<1x64x64xbf16>, vector<1x64x64xf32> -> vector<1x64x64xf32>
    "tpu.trace_stop"() : () -> ()
    %39 = tpu.reciprocal %36 {approx = true} : vector<1x64x1xf32> -> vector<1x64x1xf32>
    %40 = vector.broadcast %39 : vector<1x64x1xf32> to vector<1x64x64xf32>
    %41 = arith.mulf %38, %40 : vector<1x64x64xf32>
    %42 = vector.shape_cast %41 : vector<1x64x64xf32> to vector<64x64xf32>
    %43 = vector.shape_cast %24 : vector<64x64xf32> to vector<1x64x64xf32>
    %c4 = arith.constant 4 : index
    %c0_15 = arith.constant 0 : index
    %c0_16 = arith.constant 0 : index
    %44 = vector.load %arg6[%c4, %c0_15, %c0_16] : memref<9x64x64xf32, #tpu.memory_space<vmem>>, vector<1x64x64xf32>
    %45 = vector.shape_cast %44 : vector<1x64x64xf32> to vector<64x64xf32>
    %46 = vector.shape_cast %45 : vector<64x64xf32> to vector<1x64x64xf32>
    %47 = arith.mulf %43, %46 : vector<1x64x64xf32>
    %c9_i32 = arith.constant 9 : i32
    %48 = tpu.dynamic_rotate %24 by %c9_i32 dim 0 : vector<64x64xf32>, i32 -> vector<64x64xf32>
    %49 = vector.shape_cast %48 : vector<64x64xf32> to vector<1x64x64xf32>
    %c0_17 = arith.constant 0 : index
    %c0_18 = arith.constant 0 : index
    %c0_19 = arith.constant 0 : index
    %50 = vector.load %arg6[%c0_17, %c0_18, %c0_19] : memref<9x64x64xf32, #tpu.memory_space<vmem>>, vector<1x64x64xf32>
    %51 = vector.shape_cast %50 : vector<1x64x64xf32> to vector<64x64xf32>
    %52 = vector.shape_cast %51 : vector<64x64xf32> to vector<1x64x64xf32>
    %53 = arith.mulf %49, %52 : vector<1x64x64xf32>
    %54 = arith.addf %47, %53 : vector<1x64x64xf32>
    %c8_i32 = arith.constant 8 : i32
    %55 = tpu.dynamic_rotate %24 by %c8_i32 dim 0 : vector<64x64xf32>, i32 -> vector<64x64xf32>
    %56 = vector.shape_cast %55 : vector<64x64xf32> to vector<1x64x64xf32>
    %c1 = arith.constant 1 : index
    %c0_20 = arith.constant 0 : index
    %c0_21 = arith.constant 0 : index
    %57 = vector.load %arg6[%c1, %c0_20, %c0_21] : memref<9x64x64xf32, #tpu.memory_space<vmem>>, vector<1x64x64xf32>
    %58 = vector.shape_cast %57 : vector<1x64x64xf32> to vector<64x64xf32>
    %59 = vector.shape_cast %58 : vector<64x64xf32> to vector<1x64x64xf32>
    %60 = arith.mulf %56, %59 : vector<1x64x64xf32>
    %61 = arith.addf %54, %60 : vector<1x64x64xf32>
    %c7_i32 = arith.constant 7 : i32
    %62 = tpu.dynamic_rotate %24 by %c7_i32 dim 0 : vector<64x64xf32>, i32 -> vector<64x64xf32>
    %63 = vector.shape_cast %62 : vector<64x64xf32> to vector<1x64x64xf32>
    %c2 = arith.constant 2 : index
    %c0_22 = arith.constant 0 : index
    %c0_23 = arith.constant 0 : index
    %64 = vector.load %arg6[%c2, %c0_22, %c0_23] : memref<9x64x64xf32, #tpu.memory_space<vmem>>, vector<1x64x64xf32>
    %65 = vector.shape_cast %64 : vector<1x64x64xf32> to vector<64x64xf32>
    %66 = vector.shape_cast %65 : vector<64x64xf32> to vector<1x64x64xf32>
    %67 = arith.mulf %63, %66 : vector<1x64x64xf32>
    %68 = arith.addf %61, %67 : vector<1x64x64xf32>
    %c1_i32 = arith.constant 1 : i32
    %69 = tpu.dynamic_rotate %24 by %c1_i32 dim 0 : vector<64x64xf32>, i32 -> vector<64x64xf32>
    %70 = vector.shape_cast %69 : vector<64x64xf32> to vector<1x64x64xf32>
    %c3 = arith.constant 3 : index
    %c0_24 = arith.constant 0 : index
    %c0_25 = arith.constant 0 : index
    %71 = vector.load %arg6[%c3, %c0_24, %c0_25] : memref<9x64x64xf32, #tpu.memory_space<vmem>>, vector<1x64x64xf32>
    %72 = vector.shape_cast %71 : vector<1x64x64xf32> to vector<64x64xf32>
    %73 = vector.shape_cast %72 : vector<64x64xf32> to vector<1x64x64xf32>
    %74 = arith.mulf %70, %73 : vector<1x64x64xf32>
    %75 = arith.addf %68, %74 : vector<1x64x64xf32>
    %c63_i32 = arith.constant 63 : i32
    %76 = tpu.dynamic_rotate %24 by %c63_i32 dim 0 : vector<64x64xf32>, i32 -> vector<64x64xf32>
    %77 = vector.shape_cast %76 : vector<64x64xf32> to vector<1x64x64xf32>
    %c5 = arith.constant 5 : index
    %c0_26 = arith.constant 0 : index
    %c0_27 = arith.constant 0 : index
    %78 = vector.load %arg6[%c5, %c0_26, %c0_27] : memref<9x64x64xf32, #tpu.memory_space<vmem>>, vector<1x64x64xf32>
    %79 = vector.shape_cast %78 : vector<1x64x64xf32> to vector<64x64xf32>
    %80 = vector.shape_cast %79 : vector<64x64xf32> to vector<1x64x64xf32>
    %81 = arith.mulf %77, %80 : vector<1x64x64xf32>
    %82 = arith.addf %75, %81 : vector<1x64x64xf32>
    %c57_i32 = arith.constant 57 : i32
    %83 = tpu.dynamic_rotate %24 by %c57_i32 dim 0 : vector<64x64xf32>, i32 -> vector<64x64xf32>
    %84 = vector.shape_cast %83 : vector<64x64xf32> to vector<1x64x64xf32>
    %c6 = arith.constant 6 : index
    %c0_28 = arith.constant 0 : index
    %c0_29 = arith.constant 0 : index
    %85 = vector.load %arg6[%c6, %c0_28, %c0_29] : memref<9x64x64xf32, #tpu.memory_space<vmem>>, vector<1x64x64xf32>
    %86 = vector.shape_cast %85 : vector<1x64x64xf32> to vector<64x64xf32>
    %87 = vector.shape_cast %86 : vector<64x64xf32> to vector<1x64x64xf32>
    %88 = arith.mulf %84, %87 : vector<1x64x64xf32>
    %89 = arith.addf %82, %88 : vector<1x64x64xf32>
    %c56_i32 = arith.constant 56 : i32
    %90 = tpu.dynamic_rotate %24 by %c56_i32 dim 0 : vector<64x64xf32>, i32 -> vector<64x64xf32>
    %91 = vector.shape_cast %90 : vector<64x64xf32> to vector<1x64x64xf32>
    %c7 = arith.constant 7 : index
    %c0_30 = arith.constant 0 : index
    %c0_31 = arith.constant 0 : index
    %92 = vector.load %arg6[%c7, %c0_30, %c0_31] : memref<9x64x64xf32, #tpu.memory_space<vmem>>, vector<1x64x64xf32>
    %93 = vector.shape_cast %92 : vector<1x64x64xf32> to vector<64x64xf32>
    %94 = vector.shape_cast %93 : vector<64x64xf32> to vector<1x64x64xf32>
    %95 = arith.mulf %91, %94 : vector<1x64x64xf32>
    %96 = arith.addf %89, %95 : vector<1x64x64xf32>
    %c55_i32 = arith.constant 55 : i32
    %97 = tpu.dynamic_rotate %24 by %c55_i32 dim 0 : vector<64x64xf32>, i32 -> vector<64x64xf32>
    %98 = vector.shape_cast %97 : vector<64x64xf32> to vector<1x64x64xf32>
    %c8 = arith.constant 8 : index
    %c0_32 = arith.constant 0 : index
    %c0_33 = arith.constant 0 : index
    %99 = vector.load %arg6[%c8, %c0_32, %c0_33] : memref<9x64x64xf32, #tpu.memory_space<vmem>>, vector<1x64x64xf32>
    %100 = vector.shape_cast %99 : vector<1x64x64xf32> to vector<64x64xf32>
    %101 = vector.shape_cast %100 : vector<64x64xf32> to vector<1x64x64xf32>
    %102 = arith.mulf %98, %101 : vector<1x64x64xf32>
    %103 = arith.addf %96, %102 : vector<1x64x64xf32>
    %104 = vector.shape_cast %103 : vector<1x64x64xf32> to vector<64x64xf32>
    %c0_34 = arith.constant 0 : index
    %c0_35 = arith.constant 0 : index
    %105 = vector.load %arg7[%c0_34, %c0_35] : memref<1x64xf32, #tpu.memory_space<vmem>>, vector<1x64xf32>
    %106 = vector.broadcast %105 : vector<1x64xf32> to vector<64x64xf32>
    %107 = arith.addf %104, %106 : vector<64x64xf32>
    %108 = arith.addf %42, %107 : vector<64x64xf32>
    %109 = arith.truncf %108 : vector<64x64xf32> to vector<64x64xbf16>
    %c0_36 = arith.constant 0 : index
    %c0_37 = arith.constant 0 : index
    %110 = vector.load %arg8[%c0_36, %c0_37] : memref<64x64xbf16, #tpu.memory_space<vmem>>, vector<64x64xbf16>
    %cst_38 = arith.constant dense<0.000000e+00> : vector<64x64xf32>
    %111 = tpu.matmul %109, %110, %cst_38 {dimension_numbers = #tpu.dot_dimension_numbers<[1], [0], [0], [1], [0, 0, 1, 1], [], []>} : vector<64x64xbf16>, vector<64x64xbf16>, vector<64x64xf32> -> vector<64x64xf32>
    %c0_39 = arith.constant 0 : index
    %c0_40 = arith.constant 0 : index
    %112 = vector.load %arg9[%c0_39, %c0_40] : memref<1x64xf32, #tpu.memory_space<vmem>>, vector<1x64xf32>
    %113 = vector.broadcast %112 : vector<1x64xf32> to vector<64x64xf32>
    %114 = arith.addf %111, %113 : vector<64x64xf32>
    %115 = arith.addf %13, %114 : vector<64x64xf32>
    %116 = arith.truncf %115 : vector<64x64xf32> to vector<64x64xbf16>
    %c0_41 = arith.constant 0 : index
    %c0_42 = arith.constant 0 : index
    %117 = vector.load %arg10[%c0_41, %c0_42] : memref<64x128xbf16, #tpu.memory_space<vmem>>, vector<64x128xbf16>
    %cst_43 = arith.constant dense<0.000000e+00> : vector<64x128xf32>
    %118 = tpu.matmul %116, %117, %cst_43 {dimension_numbers = #tpu.dot_dimension_numbers<[1], [0], [0], [1], [0, 0, 1, 1], [], []>} : vector<64x64xbf16>, vector<64x128xbf16>, vector<64x128xf32> -> vector<64x128xf32>
    %c0_44 = arith.constant 0 : index
    %c0_45 = arith.constant 0 : index
    %119 = vector.load %arg11[%c0_44, %c0_45] : memref<1x128xf32, #tpu.memory_space<vmem>>, vector<1x128xf32>
    %120 = vector.broadcast %119 : vector<1x128xf32> to vector<64x128xf32>
    %121 = arith.addf %118, %120 : vector<64x128xf32>
    %122 = arith.negf %121 : vector<64x128xf32>
    %123 = math.exp %122 : vector<64x128xf32>
    %cst_46 = arith.constant 1.000000e+00 : f32
    %124 = vector.broadcast %cst_46 : f32 to vector<64x128xf32>
    %125 = arith.addf %124, %123 : vector<64x128xf32>
    %126 = arith.divf %124, %125 : vector<64x128xf32>
    %127 = arith.mulf %121, %126 : vector<64x128xf32>
    %128 = arith.truncf %127 : vector<64x128xf32> to vector<64x128xbf16>
    %c0_47 = arith.constant 0 : index
    %c0_48 = arith.constant 0 : index
    %129 = vector.load %arg12[%c0_47, %c0_48] : memref<128x64xbf16, #tpu.memory_space<vmem>>, vector<128x64xbf16>
    %cst_49 = arith.constant dense<0.000000e+00> : vector<64x64xf32>
    %130 = tpu.matmul %128, %129, %cst_49 {dimension_numbers = #tpu.dot_dimension_numbers<[1], [0], [0], [1], [0, 0, 1, 1], [], []>} : vector<64x128xbf16>, vector<128x64xbf16>, vector<64x64xf32> -> vector<64x64xf32>
    %c0_50 = arith.constant 0 : index
    %c0_51 = arith.constant 0 : index
    %131 = vector.load %arg13[%c0_50, %c0_51] : memref<1x64xf32, #tpu.memory_space<vmem>>, vector<1x64xf32>
    %132 = vector.broadcast %131 : vector<1x64xf32> to vector<64x64xf32>
    %133 = arith.addf %130, %132 : vector<64x64xf32>
    %134 = arith.addf %115, %133 : vector<64x64xf32>
    %135 = arith.truncf %12 : vector<64x64xf32> to vector<64x64xbf16>
    %136 = arith.truncf %134 : vector<64x64xf32> to vector<64x64xbf16>
    %137 = tpu.concatenate %135, %136 in 1 : vector<64x64xbf16>, vector<64x64xbf16> -> vector<64x128xbf16>
    %c0_52 = arith.constant 0 : index
    %c0_53 = arith.constant 0 : index
    %138 = vector.load %arg14[%c0_52, %c0_53] : memref<128x128xbf16, #tpu.memory_space<vmem>>, vector<128x128xbf16>
    %cst_54 = arith.constant dense<0.000000e+00> : vector<64x128xf32>
    %139 = tpu.matmul %137, %138, %cst_54 {dimension_numbers = #tpu.dot_dimension_numbers<[1], [0], [0], [1], [0, 0, 1, 1], [], []>} : vector<64x128xbf16>, vector<128x128xbf16>, vector<64x128xf32> -> vector<64x128xf32>
    %c0_55 = arith.constant 0 : index
    %c0_56 = arith.constant 0 : index
    %140 = vector.load %arg15[%c0_55, %c0_56] : memref<1x128xf32, #tpu.memory_space<vmem>>, vector<1x128xf32>
    %141 = vector.broadcast %140 : vector<1x128xf32> to vector<64x128xf32>
    %142 = arith.addf %139, %141 : vector<64x128xf32>
    %143 = arith.negf %142 : vector<64x128xf32>
    %144 = math.exp %143 : vector<64x128xf32>
    %cst_57 = arith.constant 1.000000e+00 : f32
    %145 = vector.broadcast %cst_57 : f32 to vector<64x128xf32>
    %146 = arith.addf %145, %144 : vector<64x128xf32>
    %147 = arith.divf %145, %146 : vector<64x128xf32>
    %148 = arith.mulf %142, %147 : vector<64x128xf32>
    %c0_58 = arith.constant 0 : index
    %c0_59 = arith.constant 0 : index
    %149 = vector.load %arg16[%c0_58, %c0_59] : memref<64x128xf32, #tpu.memory_space<vmem>>, vector<64x128xf32>
    tpu.vector_store %arg16[%c0_58, %c0_59], %148 {strides = array<i32>} : memref<64x128xf32, #tpu.memory_space<vmem>>, vector<64x128xf32>,
    return
  }
  func.func @transform_0(%arg0: i32) -> (i32, i32) {
    %c0_i32 = arith.constant 0 : i32
    %c0_i32_0 = arith.constant 0 : i32
    return %arg0, %c0_i32 : i32, i32
  }
  func.func @transform_1(%arg0: i32) -> (i32, i32) {
    %c0_i32 = arith.constant 0 : i32
    %c0_i32_0 = arith.constant 0 : i32
    %c0_i32_1 = arith.constant 0 : i32
    return %c0_i32, %c0_i32_0 : i32, i32
  }
  func.func @transform_2(%arg0: i32) -> (i32, i32) {
    %c0_i32 = arith.constant 0 : i32
    %c0_i32_0 = arith.constant 0 : i32
    %c0_i32_1 = arith.constant 0 : i32
    return %c0_i32, %c0_i32_0 : i32, i32
  }
  func.func @transform_3(%arg0: i32) -> (i32, i32) {
    %c0_i32 = arith.constant 0 : i32
    %c0_i32_0 = arith.constant 0 : i32
    %c0_i32_1 = arith.constant 0 : i32
    return %c0_i32, %c0_i32_0 : i32, i32
  }
  func.func @transform_4(%arg0: i32) -> (i32, i32) {
    %c0_i32 = arith.constant 0 : i32
    %c0_i32_0 = arith.constant 0 : i32
    %c0_i32_1 = arith.constant 0 : i32
    return %c0_i32, %c0_i32_0 : i32, i32
  }
  func.func @transform_5(%arg0: i32) -> (i32, i32, i32) {
    %c0_i32 = arith.constant 0 : i32
    %c0_i32_0 = arith.constant 0 : i32
    %c0_i32_1 = arith.constant 0 : i32
    %c0_i32_2 = arith.constant 0 : i32
    return %c0_i32, %c0_i32_0, %c0_i32_1 : i32, i32, i32
  }
  func.func @transform_6(%arg0: i32) -> (i32, i32) {
    %c0_i32 = arith.constant 0 : i32
    %c0_i32_0 = arith.constant 0 : i32
    %c0_i32_1 = arith.constant 0 : i32
    return %c0_i32, %c0_i32_0 : i32, i32
  }
  func.func @transform_7(%arg0: i32) -> (i32, i32) {
    %c0_i32 = arith.constant 0 : i32
    %c0_i32_0 = arith.constant 0 : i32
    %c0_i32_1 = arith.constant 0 : i32
    return %c0_i32, %c0_i32_0 : i32, i32
  }
  func.func @transform_8(%arg0: i32) -> (i32, i32) {
    %c0_i32 = arith.constant 0 : i32
    %c0_i32_0 = arith.constant 0 : i32
    %c0_i32_1 = arith.constant 0 : i32
    return %c0_i32, %c0_i32_0 : i32, i32
  }
  func.func @transform_9(%arg0: i32) -> (i32, i32) {
    %c0_i32 = arith.constant 0 : i32
    %c0_i32_0 = arith.constant 0 : i32
    %c0_i32_1 = arith.constant 0 : i32
    return %c0_i32, %c0_i32_0 : i32, i32
  }
  func.func @transform_10(%arg0: i32) -> (i32, i32) {
    %c0_i32 = arith.constant 0 : i32
    %c0_i32_0 = arith.constant 0 : i32
    %c0_i32_1 = arith.constant 0 : i32
    return %c0_i32, %c0_i32_0 : i32, i32
  }
  func.func @transform_11(%arg0: i32) -> (i32, i32) {
    %c0_i32 = arith.constant 0 : i32
    %c0_i32_0 = arith.constant 0 : i32
    %c0_i32_1 = arith.constant 0 : i32
    return %c0_i32, %c0_i32_0 : i32, i32
  }
  func.func @transform_12(%arg0: i32) -> (i32, i32) {
    %c0_i32 = arith.constant 0 : i32
    %c0_i32_0 = arith.constant 0 : i32
    %c0_i32_1 = arith.constant 0 : i32
    return %c0_i32, %c0_i32_0 : i32, i32
  }
  func.func @transform_13(%arg0: i32) -> (i32, i32) {
    %c0_i32 = arith.constant 0 : i32
    %c0_i32_0 = arith.constant 0 : i32
    %c0_i32_1 = arith.constant 0 : i32
    return %c0_i32, %c0_i32_0 : i32, i32
  }
  func.func @transform_14(%arg0: i32) -> (i32, i32) {
    %c0_i32 = arith.constant 0 : i32
    %c0_i32_0 = arith.constant 0 : i32
    %c0_i32_1 = arith.constant 0 : i32
    return %c0_i32, %c0_i32_0 : i32, i32
  }
  func.func @transform_15(%arg0: i32) -> (i32, i32) {
    %c0_i32 = arith.constant 0 : i32
    %c0_i32_0 = arith.constant 0 : i32
    return %arg0, %c0_i32 : i32, i32
  }
}

</mosaic_0001>

<llo_original>
// kernel: cct_forward.1
$region0: #{cct_forward.1}
  #allocation0 [shape = 'u32[]', space=smem, size = 0x4, offset = 0x4, fixed_abs, tag = 'smem constant byte address 0x4 - core index']
  #allocation1 [shape = 'u32[144,128]{1,0:T(1,128)}', space=vmem, size = 0x12000, scoped, tag = 'internal scratch']
  %s0 = inlined_call_operand.vmem [shape: bf16[128,128], index: 0, kind: input, shape index: {}]
  %s1 = inlined_call_operand.vmem [shape: bf16[128,128], index: 1, kind: input, shape index: {}]
  %s2 = inlined_call_operand.vmem [shape: f32[1,128], index: 2, kind: input, shape index: {}]
  %s3 = inlined_call_operand.vmem [shape: bf16[64,128], index: 3, kind: input, shape index: {}]
  %s4 = inlined_call_operand.vmem [shape: f32[1,128], index: 4, kind: input, shape index: {}]
  %s5 = inlined_call_operand.vmem [shape: f32[9,64,64], index: 5, kind: input, shape index: {}]
  %s6 = inlined_call_operand.vmem [shape: f32[1,64], index: 6, kind: input, shape index: {}]
  %s7 = inlined_call_operand.vmem [shape: bf16[64,64], index: 7, kind: input, shape index: {}]
  %s8 = inlined_call_operand.vmem [shape: f32[1,64], index: 8, kind: input, shape index: {}]
  %s9 = inlined_call_operand.vmem [shape: bf16[64,128], index: 9, kind: input, shape index: {}]
  %s10 = inlined_call_operand.vmem [shape: f32[1,128], index: 10, kind: input, shape index: {}]
  %s11 = inlined_call_operand.vmem [shape: bf16[128,64], index: 11, kind: input, shape index: {}]
  %s12 = inlined_call_operand.vmem [shape: f32[1,64], index: 12, kind: input, shape index: {}]
  %s13 = inlined_call_operand.vmem [shape: bf16[128,128], index: 13, kind: input, shape index: {}]
  %s14 = inlined_call_operand.vmem [shape: f32[1,128], index: 14, kind: input, shape index: {}]
  %s15 = inlined_call_operand.hbm [shape: f32[128,128], index: 15, kind: output, shape index: {}]
  %s16 = sld [smem:[#allocation0]]
  $region93: #{cct_forward.1} parent=0
    _
  %s18 = ssub.s32 1, %s16
  %s19 = scalar_select 0, %s18, %s16
  $region1: #{cct_forward.1} parent=0
    #allocation2 [shape = 'u8[65536]{0}', space=vmem, size = 0x10000, scoped, tag = 'output window, operand 0']
    #allocation3 [shape = 's32[2]{0}', space=sflag, size = 0x8, scoped, tag = 'scoped memory for cct_forward.1']
    %20 = vsyncpa [#allocation3], 0
    %s21 = scalar_lea.sflag [#allocation3], 1
    %22 = vsyncpa %s21, 0
    loop: start=0, step=1, limit=4
    $region2: #{cct_forward.1} parent=1 // loop_pre_header
      _
    $region3: #{cct_forward.1} parent=1 // loop_header
      %s24 = sphi 0, %s28
      %p25 = scmp.ge.s32.totalorder %s24, 4
      %s34 = sphi 0, %s36
      %s37 = sphi 0, %s34
      %s38 = sphi 0, %s37
      %s54 = sphi 0, %s38
      %s58 = sphi 0, %s58
      %s60 = sphi 0, %s58
      %s61 = sphi 0, %s60
      %s75 = sphi 0, %s61
      %s79 = sphi 0, %s79
      %s81 = sphi 0, %s79
      %s82 = sphi 0, %s81
      %s96 = sphi 0, %s82
      %s100 = sphi 0, %s100
      %s102 = sphi 0, %s100
      %s103 = sphi 0, %s102
      %s117 = sphi 0, %s103
      %s121 = sphi 0, %s121
      %s123 = sphi 0, %s121
      %s124 = sphi 0, %s123
      %s138 = sphi 0, %s124
      %s142 = sphi 0, %s142
      %s144 = sphi 0, %s142
      %s145 = sphi 0, %s144
      %s159 = sphi 0, %s145
      %s163 = sphi 0, %s163
      %s165 = sphi 0, %s163
      %s166 = sphi 0, %s165
      %s180 = sphi 0, %s166
      %s184 = sphi 0, %s184
      %s186 = sphi 0, %s184
      %s187 = sphi 0, %s186
      %s201 = sphi 0, %s187
      %s205 = sphi 0, %s205
      %s207 = sphi 0, %s205
      %s208 = sphi 0, %s207
      %s222 = sphi 0, %s208
      %s226 = sphi 0, %s226
      %s228 = sphi 0, %s226
      %s229 = sphi 0, %s228
      %s243 = sphi 0, %s229
      %s247 = sphi 0, %s247
      %s249 = sphi 0, %s247
      %s250 = sphi 0, %s249
      %s264 = sphi 0, %s250
      %s268 = sphi 0, %s268
      %s270 = sphi 0, %s268
      %s271 = sphi 0, %s270
      %s285 = sphi 0, %s271
      %s289 = sphi 0, %s289
      %s291 = sphi 0, %s289
      %s292 = sphi 0, %s291
      %s306 = sphi 0, %s292
      %s310 = sphi 0, %s310
      %s312 = sphi 0, %s310
      %s313 = sphi 0, %s312
      %s327 = sphi 0, %s313
      %s331 = sphi 0, %s331
      %s333 = sphi 0, %s331
      %s334 = sphi 0, %s333
      %s348 = sphi 0, %s334
      %s354 = sphi 0, %s356
      %s357 = sphi 0, %s354
      %s358 = sphi 0, %s357
      %s374 = sphi 0, %s358
    $region4: #{cct_forward.1} parent=1 // loop_header_branch
      %27 = sbr.rel (%p25) target = $region8
    $region5: #{cct_forward.1} parent=1 // loop_body
      %s29 = ssub.s32 %s24, 1
      %s30 = ssub.s32 %s24, 2
      %s31 = sadd.s32 %s24, 1
      %s32 = ssub.s32 %s24, %s31
      %p33 = scmp.eq.s32.totalorder %s32, 0
      %s35 = sadd.s32 %s34, 1
      %s36 = scalar_select %p33, %s34, %s35
      %p39 = pneg %p33
      %p40 = scmp.eq.s32.totalorder %s24, 1
      %p41 = por %p39, %p40
      %p42 = scmp.ne.s32.totalorder %s34, %s37
      %p43 = scmp.eq.s32.totalorder %s24, 0
      %p44 = por %p42, %p43
      %p45 = scmp.ne.s32.totalorder %s34, %s37
      %p46 = scmp.eq.s32.totalorder %s29, 1
      %p47 = por %p45, %p46
      %p48 = scmp.ne.s32.totalorder %s37, %s38
      %p49 = scmp.eq.s32.totalorder %s29, 0
      %p50 = por %p48, %p49
      %p51 = scmp.ne.s32.totalorder %s37, %s38
      %p52 = scmp.eq.s32.totalorder %s30, 1
      %p53 = por %p51, %p52
      %p55 = scmp.ne.s32.totalorder %s38, %s54
      %p56 = scmp.eq.s32.totalorder %s30, 0
      %p57 = por %p55, %p56
      %s59 = sadd.s32 %s58, 1
      %p62 = scmp.eq.s32.totalorder %s24, 1
      %p63 = scmp.ne.s32.totalorder %s58, %s60
      %p64 = scmp.eq.s32.totalorder %s24, 0
      %p65 = por %p63, %p64
      %p66 = scmp.ne.s32.totalorder %s58, %s60
      %p67 = scmp.eq.s32.totalorder %s29, 1
      %p68 = por %p66, %p67
      %p69 = scmp.ne.s32.totalorder %s60, %s61
      %p70 = scmp.eq.s32.totalorder %s29, 0
      %p71 = por %p69, %p70
      %p72 = scmp.ne.s32.totalorder %s60, %s61
      %p73 = scmp.eq.s32.totalorder %s30, 1
      %p74 = por %p72, %p73
      %p76 = scmp.ne.s32.totalorder %s61, %s75
      %p77 = scmp.eq.s32.totalorder %s30, 0
      %p78 = por %p76, %p77
      %s80 = sadd.s32 %s79, 1
      %p83 = scmp.eq.s32.totalorder %s24, 1
      %p84 = scmp.ne.s32.totalorder %s79, %s81
      %p85 = scmp.eq.s32.totalorder %s24, 0
      %p86 = por %p84, %p85
      %p87 = scmp.ne.s32.totalorder %s79, %s81
      %p88 = scmp.eq.s32.totalorder %s29, 1
      %p89 = por %p87, %p88
      %p90 = scmp.ne.s32.totalorder %s81, %s82
      %p91 = scmp.eq.s32.totalorder %s29, 0
      %p92 = por %p90, %p91
      %p93 = scmp.ne.s32.totalorder %s81, %s82
      %p94 = scmp.eq.s32.totalorder %s30, 1
      %p95 = por %p93, %p94
      %p97 = scmp.ne.s32.totalorder %s82, %s96
      %p98 = scmp.eq.s32.totalorder %s30, 0
      %p99 = por %p97, %p98
      %s101 = sadd.s32 %s100, 1
      %p104 = scmp.eq.s32.totalorder %s24, 1
      %p105 = scmp.ne.s32.totalorder %s100, %s102
      %p106 = scmp.eq.s32.totalorder %s24, 0
      %p107 = por %p105, %p106
      %p108 = scmp.ne.s32.totalorder %s100, %s102
      %p109 = scmp.eq.s32.totalorder %s29, 1
      %p110 = por %p108, %p109
      %p111 = scmp.ne.s32.totalorder %s102, %s103
      %p112 = scmp.eq.s32.totalorder %s29, 0
      %p113 = por %p111, %p112
      %p114 = scmp.ne.s32.totalorder %s102, %s103
      %p115 = scmp.eq.s32.totalorder %s30, 1
      %p116 = por %p114, %p115
      %p118 = scmp.ne.s32.totalorder %s103, %s117
      %p119 = scmp.eq.s32.totalorder %s30, 0
      %p120 = por %p118, %p119
      %s122 = sadd.s32 %s121, 1
      %p125 = scmp.eq.s32.totalorder %s24, 1
      %p126 = scmp.ne.s32.totalorder %s121, %s123
      %p127 = scmp.eq.s32.totalorder %s24, 0
      %p128 = por %p126, %p127
      %p129 = scmp.ne.s32.totalorder %s121, %s123
      %p130 = scmp.eq.s32.totalorder %s29, 1
      %p131 = por %p129, %p130
      %p132 = scmp.ne.s32.totalorder %s123, %s124
      %p133 = scmp.eq.s32.totalorder %s29, 0
      %p134 = por %p132, %p133
      %p135 = scmp.ne.s32.totalorder %s123, %s124
      %p136 = scmp.eq.s32.totalorder %s30, 1
      %p137 = por %p135, %p136
      %p139 = scmp.ne.s32.totalorder %s124, %s138
      %p140 = scmp.eq.s32.totalorder %s30, 0
      %p141 = por %p139, %p140
      %s143 = sadd.s32 %s142, 1
      %p146 = scmp.eq.s32.totalorder %s24, 1
      %p147 = scmp.ne.s32.totalorder %s142, %s144
      %p148 = scmp.eq.s32.totalorder %s24, 0
      %p149 = por %p147, %p148
      %p150 = scmp.ne.s32.totalorder %s142, %s144
      %p151 = scmp.eq.s32.totalorder %s29, 1
      %p152 = por %p150, %p151
      %p153 = scmp.ne.s32.totalorder %s144, %s145
      %p154 = scmp.eq.s32.totalorder %s29, 0
      %p155 = por %p153, %p154
      %p156 = scmp.ne.s32.totalorder %s144, %s145
      %p157 = scmp.eq.s32.totalorder %s30, 1
      %p158 = por %p156, %p157
      %p160 = scmp.ne.s32.totalorder %s145, %s159
      %p161 = scmp.eq.s32.totalorder %s30, 0
      %p162 = por %p160, %p161
      %s164 = sadd.s32 %s163, 1
      %p167 = scmp.eq.s32.totalorder %s24, 1
      %p168 = scmp.ne.s32.totalorder %s163, %s165
      %p169 = scmp.eq.s32.totalorder %s24, 0
      %p170 = por %p168, %p169
      %p171 = scmp.ne.s32.totalorder %s163, %s165
      %p172 = scmp.eq.s32.totalorder %s29, 1
      %p173 = por %p171, %p172
      %p174 = scmp.ne.s32.totalorder %s165, %s166
      %p175 = scmp.eq.s32.totalorder %s29, 0
      %p176 = por %p174, %p175
      %p177 = scmp.ne.s32.totalorder %s165, %s166
      %p178 = scmp.eq.s32.totalorder %s30, 1
      %p179 = por %p177, %p178
      %p181 = scmp.ne.s32.totalorder %s166, %s180
      %p182 = scmp.eq.s32.totalorder %s30, 0
      %p183 = por %p181, %p182
      %s185 = sadd.s32 %s184, 1
      %p188 = scmp.eq.s32.totalorder %s24, 1
      %p189 = scmp.ne.s32.totalorder %s184, %s186
      %p190 = scmp.eq.s32.totalorder %s24, 0
      %p191 = por %p189, %p190
      %p192 = scmp.ne.s32.totalorder %s184, %s186
      %p193 = scmp.eq.s32.totalorder %s29, 1
      %p194 = por %p192, %p193
      %p195 = scmp.ne.s32.totalorder %s186, %s187
      %p196 = scmp.eq.s32.totalorder %s29, 0
      %p197 = por %p195, %p196
      %p198 = scmp.ne.s32.totalorder %s186, %s187
      %p199 = scmp.eq.s32.totalorder %s30, 1
      %p200 = por %p198, %p199
      %p202 = scmp.ne.s32.totalorder %s187, %s201
      %p203 = scmp.eq.s32.totalorder %s30, 0
      %p204 = por %p202, %p203
      %s206 = sadd.s32 %s205, 1
      %p209 = scmp.eq.s32.totalorder %s24, 1
      %p210 = scmp.ne.s32.totalorder %s205, %s207
      %p211 = scmp.eq.s32.totalorder %s24, 0
      %p212 = por %p210, %p211
      %p213 = scmp.ne.s32.totalorder %s205, %s207
      %p214 = scmp.eq.s32.totalorder %s29, 1
      %p215 = por %p213, %p214
      %p216 = scmp.ne.s32.totalorder %s207, %s208
      %p217 = scmp.eq.s32.totalorder %s29, 0
      %p218 = por %p216, %p217
      %p219 = scmp.ne.s32.totalorder %s207, %s208
      %p220 = scmp.eq.s32.totalorder %s30, 1
      %p221 = por %p219, %p220
      %p223 = scmp.ne.s32.totalorder %s208, %s222
      %p224 = scmp.eq.s32.totalorder %s30, 0
      %p225 = por %p223, %p224
      %s227 = sadd.s32 %s226, 1
      %p230 = scmp.eq.s32.totalorder %s24, 1
      %p231 = scmp.ne.s32.totalorder %s226, %s228
      %p232 = scmp.eq.s32.totalorder %s24, 0
      %p233 = por %p231, %p232
      %p234 = scmp.ne.s32.totalorder %s226, %s228
      %p235 = scmp.eq.s32.totalorder %s29, 1
      %p236 = por %p234, %p235
      %p237 = scmp.ne.s32.totalorder %s228, %s229
      %p238 = scmp.eq.s32.totalorder %s29, 0
      %p239 = por %p237, %p238
      %p240 = scmp.ne.s32.totalorder %s228, %s229
      %p241 = scmp.eq.s32.totalorder %s30, 1
      %p242 = por %p240, %p241
      %p244 = scmp.ne.s32.totalorder %s229, %s243
      %p245 = scmp.eq.s32.totalorder %s30, 0
      %p246 = por %p244, %p245
      %s248 = sadd.s32 %s247, 1
      %p251 = scmp.eq.s32.totalorder %s24, 1
      %p252 = scmp.ne.s32.totalorder %s247, %s249
      %p253 = scmp.eq.s32.totalorder %s24, 0
      %p254 = por %p252, %p253
      %p255 = scmp.ne.s32.totalorder %s247, %s249
      %p256 = scmp.eq.s32.totalorder %s29, 1
      %p257 = por %p255, %p256
      %p258 = scmp.ne.s32.totalorder %s249, %s250
      %p259 = scmp.eq.s32.totalorder %s29, 0
      %p260 = por %p258, %p259
      %p261 = scmp.ne.s32.totalorder %s249, %s250
      %p262 = scmp.eq.s32.totalorder %s30, 1
      %p263 = por %p261, %p262
      %p265 = scmp.ne.s32.totalorder %s250, %s264
      %p266 = scmp.eq.s32.totalorder %s30, 0
      %p267 = por %p265, %p266
      %s269 = sadd.s32 %s268, 1
      %p272 = scmp.eq.s32.totalorder %s24, 1
      %p273 = scmp.ne.s32.totalorder %s268, %s270
      %p274 = scmp.eq.s32.totalorder %s24, 0
      %p275 = por %p273, %p274
      %p276 = scmp.ne.s32.totalorder %s268, %s270
      %p277 = scmp.eq.s32.totalorder %s29, 1
      %p278 = por %p276, %p277
      %p279 = scmp.ne.s32.totalorder %s270, %s271
      %p280 = scmp.eq.s32.totalorder %s29, 0
      %p281 = por %p279, %p280
      %p282 = scmp.ne.s32.totalorder %s270, %s271
      %p283 = scmp.eq.s32.totalorder %s30, 1
      %p284 = por %p282, %p283
      %p286 = scmp.ne.s32.totalorder %s271, %s285
      %p287 = scmp.eq.s32.totalorder %s30, 0
      %p288 = por %p286, %p287
      %s290 = sadd.s32 %s289, 1
      %p293 = scmp.eq.s32.totalorder %s24, 1
      %p294 = scmp.ne.s32.totalorder %s289, %s291
      %p295 = scmp.eq.s32.totalorder %s24, 0
      %p296 = por %p294, %p295
      %p297 = scmp.ne.s32.totalorder %s289, %s291
      %p298 = scmp.eq.s32.totalorder %s29, 1
      %p299 = por %p297, %p298
      %p300 = scmp.ne.s32.totalorder %s291, %s292
      %p301 = scmp.eq.s32.totalorder %s29, 0
      %p302 = por %p300, %p301
      %p303 = scmp.ne.s32.totalorder %s291, %s292
      %p304 = scmp.eq.s32.totalorder %s30, 1
      %p305 = por %p303, %p304
      %p307 = scmp.ne.s32.totalorder %s292, %s306
      %p308 = scmp.eq.s32.totalorder %s30, 0
      %p309 = por %p307, %p308
      %s311 = sadd.s32 %s310, 1
      %p314 = scmp.eq.s32.totalorder %s24, 1
      %p315 = scmp.ne.s32.totalorder %s310, %s312
      %p316 = scmp.eq.s32.totalorder %s24, 0
      %p317 = por %p315, %p316
      %p318 = scmp.ne.s32.totalorder %s310, %s312
      %p319 = scmp.eq.s32.totalorder %s29, 1
      %p320 = por %p318, %p319
      %p321 = scmp.ne.s32.totalorder %s312, %s313
      %p322 = scmp.eq.s32.totalorder %s29, 0
      %p323 = por %p321, %p322
      %p324 = scmp.ne.s32.totalorder %s312, %s313
      %p325 = scmp.eq.s32.totalorder %s30, 1
      %p326 = por %p324, %p325
      %p328 = scmp.ne.s32.totalorder %s313, %s327
      %p329 = scmp.eq.s32.totalorder %s30, 0
      %p330 = por %p328, %p329
      %s332 = sadd.s32 %s331, 1
      %p335 = scmp.eq.s32.totalorder %s24, 1
      %p336 = scmp.ne.s32.totalorder %s331, %s333
      %p337 = scmp.eq.s32.totalorder %s24, 0
      %p338 = por %p336, %p337
      %p339 = scmp.ne.s32.totalorder %s331, %s333
      %p340 = scmp.eq.s32.totalorder %s29, 1
      %p341 = por %p339, %p340
      %p342 = scmp.ne.s32.totalorder %s333, %s334
      %p343 = scmp.eq.s32.totalorder %s29, 0
      %p344 = por %p342, %p343
      %p345 = scmp.ne.s32.totalorder %s333, %s334
      %p346 = scmp.eq.s32.totalorder %s30, 1
      %p347 = por %p345, %p346
      %p349 = scmp.ne.s32.totalorder %s334, %s348
      %p350 = scmp.eq.s32.totalorder %s30, 0
      %p351 = por %p349, %p350
      %s352 = ssub.s32 %s24, %s31
      %p353 = scmp.eq.s32.totalorder %s352, 0
      %s355 = sadd.s32 %s354, 1
      %s356 = scalar_select %p353, %s354, %s355
      %p359 = pneg %p353
      %p360 = scmp.eq.s32.totalorder %s24, 1
      %p361 = por %p359, %p360
      %p362 = scmp.ne.s32.totalorder %s354, %s357
      %p363 = scmp.eq.s32.totalorder %s24, 0
      %p364 = por %p362, %p363
      %p365 = scmp.ne.s32.totalorder %s354, %s357
      %p366 = scmp.eq.s32.totalorder %s29, 1
      %p367 = por %p365, %p366
      %p368 = scmp.ne.s32.totalorder %s357, %s358
      %p369 = scmp.eq.s32.totalorder %s29, 0
      %p370 = por %p368, %p369
      %p371 = scmp.ne.s32.totalorder %s357, %s358
      %p372 = scmp.eq.s32.totalorder %s30, 1
      %p373 = por %p371, %p372
      %p375 = scmp.ne.s32.totalorder %s358, %s374
      %p376 = scmp.eq.s32.totalorder %s30, 0
      %p377 = por %p375, %p376
      %p378 = scmp.le.s32.totalorder 1, %s24
      %p379 = scmp.lt.s32.totalorder %s24, 3
      %p380 = pnand %p378, %p379
      %p381 = pneg %p380
      // Predicated region
      $region9: #{cct_forward.1} parent=5 // pred_check
        _
      $region10: #{cct_forward.1} parent=5 // pred_check_branch
        %383 = sbr.rel (%p380) target = $region12
      $region11: #{cct_forward.1} parent=5 // pred_region
        %s384 = ssub.s32 %s24, 1
        // Predicated region
        $region13: #{cct_forward.1} parent=11 // pred_check
          %p385 = pneg %p71
        $region14: #{cct_forward.1} parent=11 // pred_check_branch
          %387 = sbr.rel (%p385) target = $region16
        $region15: #{cct_forward.1} parent=11 // pred_region
          _
        $region16: #{cct_forward.1} parent=11 // pred_fallthru
          _
        // Predicated region
        $region17: #{cct_forward.1} parent=11 // pred_check
          %p388 = pneg %p92
        $region18: #{cct_forward.1} parent=11 // pred_check_branch
          %390 = sbr.rel (%p388) target = $region20
        $region19: #{cct_forward.1} parent=11 // pred_region
          _
        $region20: #{cct_forward.1} parent=11 // pred_fallthru
          _
        // Predicated region
        $region21: #{cct_forward.1} parent=11 // pred_check
          %p391 = pneg %p113
        $region22: #{cct_forward.1} parent=11 // pred_check_branch
          %393 = sbr.rel (%p391) target = $region24
        $region23: #{cct_forward.1} parent=11 // pred_region
          _
        $region24: #{cct_forward.1} parent=11 // pred_fallthru
          _
        // Predicated region
        $region25: #{cct_forward.1} parent=11 // pred_check
          %p394 = pneg %p134
        $region26: #{cct_forward.1} parent=11 // pred_check_branch
          %396 = sbr.rel (%p394) target = $region28
        $region27: #{cct_forward.1} parent=11 // pred_region
          _
        $region28: #{cct_forward.1} parent=11 // pred_fallthru
          _
        // Predicated region
        $region29: #{cct_forward.1} parent=11 // pred_check
          %p397 = pneg %p155
        $region30: #{cct_forward.1} parent=11 // pred_check_branch
          %399 = sbr.rel (%p397) target = $region32
        $region31: #{cct_forward.1} parent=11 // pred_region
          _
        $region32: #{cct_forward.1} parent=11 // pred_fallthru
          _
        // Predicated region
        $region33: #{cct_forward.1} parent=11 // pred_check
          %p400 = pneg %p176
        $region34: #{cct_forward.1} parent=11 // pred_check_branch
          %402 = sbr.rel (%p400) target = $region36
        $region35: #{cct_forward.1} parent=11 // pred_region
          _
        $region36: #{cct_forward.1} parent=11 // pred_fallthru
          _
        // Predicated region
        $region37: #{cct_forward.1} parent=11 // pred_check
          %p403 = pneg %p197
        $region38: #{cct_forward.1} parent=11 // pred_check_branch
          %405 = sbr.rel (%p403) target = $region40
        $region39: #{cct_forward.1} parent=11 // pred_region
          _
        $region40: #{cct_forward.1} parent=11 // pred_fallthru
          _
        // Predicated region
        $region41: #{cct_forward.1} parent=11 // pred_check
          %p406 = pneg %p218
        $region42: #{cct_forward.1} parent=11 // pred_check_branch
          %408 = sbr.rel (%p406) target = $region44
        $region43: #{cct_forward.1} parent=11 // pred_region
          _
        $region44: #{cct_forward.1} parent=11 // pred_fallthru
          _
        // Predicated region
        $region45: #{cct_forward.1} parent=11 // pred_check
          %p409 = pneg %p239
        $region46: #{cct_forward.1} parent=11 // pred_check_branch
          %411 = sbr.rel (%p409) target = $region48
        $region47: #{cct_forward.1} parent=11 // pred_region
          _
        $region48: #{cct_forward.1} parent=11 // pred_fallthru
          _
        // Predicated region
        $region49: #{cct_forward.1} parent=11 // pred_check
          %p412 = pneg %p260
        $region50: #{cct_forward.1} parent=11 // pred_check_branch
          %414 = sbr.rel (%p412) target = $region52
        $region51: #{cct_forward.1} parent=11 // pred_region
          _
        $region52: #{cct_forward.1} parent=11 // pred_fallthru
          _
        // Predicated region
        $region53: #{cct_forward.1} parent=11 // pred_check
          %p415 = pneg %p281
        $region54: #{cct_forward.1} parent=11 // pred_check_branch
          %417 = sbr.rel (%p415) target = $region56
        $region55: #{cct_forward.1} parent=11 // pred_region
          _
        $region56: #{cct_forward.1} parent=11 // pred_fallthru
          _
        // Predicated region
        $region57: #{cct_forward.1} parent=11 // pred_check
          %p418 = pneg %p302
        $region58: #{cct_forward.1} parent=11 // pred_check_branch
          %420 = sbr.rel (%p418) target = $region60
        $region59: #{cct_forward.1} parent=11 // pred_region
          _
        $region60: #{cct_forward.1} parent=11 // pred_fallthru
          _
        // Predicated region
        $region61: #{cct_forward.1} parent=11 // pred_check
          %p421 = pneg %p323
        $region62: #{cct_forward.1} parent=11 // pred_check_branch
          %423 = sbr.rel (%p421) target = $region64
        $region63: #{cct_forward.1} parent=11 // pred_region
          _
        $region64: #{cct_forward.1} parent=11 // pred_fallthru
          _
        // Predicated region
        $region65: #{cct_forward.1} parent=11 // pred_check
          %p424 = pneg %p344
        $region66: #{cct_forward.1} parent=11 // pred_check_branch
          %426 = sbr.rel (%p424) target = $region68
        $region67: #{cct_forward.1} parent=11 // pred_region
          _
        $region68: #{cct_forward.1} parent=11 // pred_fallthru
          _
      $region12: #{cct_forward.1} parent=5 // pred_fallthru
        _
      %p427 = scmp.lt.s32.totalorder %s24, 2
      // Predicated region
      $region69: #{cct_forward.1} parent=5 // pred_check
        %p428 = pneg %p427
      $region70: #{cct_forward.1} parent=5 // pred_check_branch
        %430 = sbr.rel (%p428) target = $region72
      $region71: #{cct_forward.1} parent=5 // pred_region
        // Predicated region
        $region73: #{cct_forward.1} parent=71 // pred_check
          %p431 = pneg %p44
        $region74: #{cct_forward.1} parent=71 // pred_check_branch
          %433 = sbr.rel (%p431) target = $region76
        $region75: #{cct_forward.1} parent=71 // pred_region
          %s434 = smul.u32 8, %s24
          %p435 = scmp.lt.s32.totalorder %s434, 15
          %s436 = scalar_select %p435, %s434, 15
          %s437 = smul.addr %s436, 4
          %s438 = scalar_lea.vmem %s0, %s437
          %s439 = smul.u32 8, %s24
        $region76: #{cct_forward.1} parent=71 // pred_fallthru
          _
      $region72: #{cct_forward.1} parent=5 // pred_fallthru
        _
      %p440 = scmp.le.s32.totalorder 1, %s24
      %p441 = scmp.lt.s32.totalorder %s24, 3
      %p442 = pnand %p440, %p441
      %p443 = pneg %p442
      // Predicated region
      $region77: #{cct_forward.1} parent=5 // pred_check
        _
      $region78: #{cct_forward.1} parent=5 // pred_check_branch
        %445 = sbr.rel (%p442) target = $region80
      $region79: #{cct_forward.1} parent=5 // pred_region
        %s446 = ssub.s32 %s24, 1
        %s447 = smul.u32 8, %s29
        %p448 = scmp.lt.s32.totalorder %s447, 15
        %s449 = scalar_select %p448, %s447, 15
        %s450 = smul.addr %s449, 4
        %s451 = scalar_lea.vmem %s0, %s450
        %p452 = pneg %p50
        %p453 = pneg %p47
        %p454 = pneg %p71
        %p455 = pneg %p68
        %p456 = pneg %p92
        %p457 = pneg %p89
        %p458 = pneg %p113
        %p459 = pneg %p110
        %p460 = pneg %p134
        %p461 = pneg %p131
        %p462 = pneg %p155
        %p463 = pneg %p152
        %p464 = pneg %p176
        %p465 = pneg %p173
        %p466 = pneg %p197
        %p467 = pneg %p194
        %p468 = pneg %p218
        %p469 = pneg %p215
        %p470 = pneg %p239
        %p471 = pneg %p236
        %p472 = pneg %p260
        %p473 = pneg %p257
        %p474 = pneg %p281
        %p475 = pneg %p278
        %p476 = pneg %p302
        %p477 = pneg %p299
        %p478 = pneg %p323
        %p479 = pneg %p320
        %p480 = pneg %p344
        %p481 = pneg %p341
        %p482 = pneg %p370
        %p483 = pneg %p367
        %s484 = sand.u32 %s357, 1
        %s485 = scalar_lea.sflag [#allocation3], %s484
        %s486 = sand.u32 %s357, 1
        %s487 = smul.addr %s486, 64
        %s488 = scalar_lea.vmem [#allocation2], %s487
        %s489 = smul.u32 8, %s29
        %p490 = scmp.lt.s32.totalorder %s489, 15
        %s491 = scalar_select %p490, %s489, 15
        %s492 = smul.addr %s491, 4
        %s493 = scalar_lea.vmem %s0, %s492
        %s494 = smul.u32 8, %s29
        %s495 = smul.u32 8, %s29
        %v497 = vld [vmem:[%s493] sm:$0xf]
        %v498 = vld [vmem:[%s493 + $0x4] sm:$0xf]
        %v499 = vld [vmem:[%s493 + $0x8] sm:$0xf]
        %v500 = vld [vmem:[%s493 + $0xc] sm:$0xf]
        %v501 = vld [vmem:[%s493 + $0x10] sm:$0xf]
        %v502 = vld [vmem:[%s493 + $0x14] sm:$0xf]
        %v503 = vld [vmem:[%s493 + $0x18] sm:$0xf]
        %v504 = vld [vmem:[%s493 + $0x1c] sm:$0xf]
        %v505 = vld [vmem:[%s1] sm:$0xf]
        %v506 = vld [vmem:[%s1 + $0x4] sm:$0xf]
        %v507 = vld [vmem:[%s1 + $0x8] sm:$0xf]
        %v508 = vld [vmem:[%s1 + $0xc] sm:$0xf]
        %v509 = vld [vmem:[%s1 + $0x10] sm:$0xf]
        %v510 = vld [vmem:[%s1 + $0x14] sm:$0xf]
        %v511 = vld [vmem:[%s1 + $0x18] sm:$0xf]
        %v512 = vld [vmem:[%s1 + $0x1c] sm:$0xf]
        %v513 = vld [vmem:[%s1 + $0x20] sm:$0xf]
        %v514 = vld [vmem:[%s1 + $0x24] sm:$0xf]
        %v515 = vld [vmem:[%s1 + $0x28] sm:$0xf]
        %v516 = vld [vmem:[%s1 + $0x2c] sm:$0xf]
        %v517 = vld [vmem:[%s1 + $0x30] sm:$0xf]
        %v518 = vld [vmem:[%s1 + $0x34] sm:$0xf]
        %v519 = vld [vmem:[%s1 + $0x38] sm:$0xf]
        %v520 = vld [vmem:[%s1 + $0x3c] sm:$0xf]
        %v521 = vld [vmem:[%s2] sm:$0x1]
        %v523 = vlaneseq
        %v524 = vshrl.u32 %v523, 7
        %v525 = vsub.s32 0, %v524
        %v526 = vrot.slane %v521, %v525
        %v536 = vunpack.c.l.b16 %v497
        %v537 = vunpack.c.l.b16 %v498
        %v538 = vunpack.c.l.b16 %v499
        %v539 = vunpack.c.l.b16 %v500
        %v540 = vunpack.c.l.b16 %v501
        %v541 = vunpack.c.l.b16 %v502
        %v542 = vunpack.c.l.b16 %v503
        %v543 = vunpack.c.l.b16 %v504
        %v544 = vpack.c.b16 %v537, %v536
        %v545 = vpack.c.b16 %v539, %v538
        %v546 = vpack.c.b16 %v541, %v540
        %v547 = vpack.c.b16 %v543, %v542
        %v568 = vunpack.c.l.b16 %v505
        %v569 = vunpack.c.l.b16 %v506
        %v570 = vunpack.c.l.b16 %v507
        %v571 = vunpack.c.l.b16 %v508
        %v572 = vunpack.c.l.b16 %v509
        %v573 = vunpack.c.l.b16 %v510
        %v574 = vunpack.c.l.b16 %v511
        %v575 = vunpack.c.l.b16 %v512
        %v576 = vunpack.c.l.b16 %v513
        %v577 = vunpack.c.l.b16 %v514
        %v578 = vunpack.c.l.b16 %v515
        %v579 = vunpack.c.l.b16 %v516
        %v580 = vunpack.c.l.b16 %v517
        %v581 = vunpack.c.l.b16 %v518
        %v582 = vunpack.c.l.b16 %v519
        %v583 = vunpack.c.l.b16 %v520
        %v584 = vpack.c.b16 %v569, %v568
        %v585 = vpack.c.b16 %v571, %v570
        %v586 = vpack.c.b16 %v573, %v572
        %v587 = vpack.c.b16 %v575, %v574
        %v588 = vpack.c.b16 %v577, %v576
        %v589 = vpack.c.b16 %v579, %v578
        %v590 = vpack.c.b16 %v581, %v580
        %v591 = vpack.c.b16 %v583, %v582
        %600 = vmatprep.subr.bf16.mxu0 0
        %601 = vmatpush1.bf16.msra.mxu0 %v591
        %602 = vmatprep.subr.bf16.mxu0 0
        %603 = vmatpush1.bf16.msra.mxu0 %v590
        %604 = vmatprep.subr.bf16.mxu0 0
        %605 = vmatpush1.bf16.msra.mxu0 %v589
        %606 = vmatprep.subr.bf16.mxu0 0
        %607 = vmatpush1.bf16.msra.mxu0 %v588
        %608 = vmatprep.subr.bf16.mxu0 0
        %609 = vmatpush1.bf16.msra.mxu0 %v587
        %610 = vmatprep.subr.bf16.mxu0 0
        %611 = vmatpush1.bf16.msra.mxu0 %v586
        %612 = vmatprep.subr.bf16.mxu0 0
        %613 = vmatpush1.bf16.msra.mxu0 %v585
        %614 = vmatprep.subr.bf16.mxu0 0
        %615 = vmatpush1.bf16.msra.mxu0 %v584
        %616 = vmatprep.subr.bf16.mxu0 0
        %617 = vmatpush2.bf16.msra.mxu0 0
        %618 = vmatprep.subr.bf16.mxu0 0
        %619 = vmatpush2.bf16.msra.mxu0 0
        %620 = vmatprep.subr.bf16.mxu0 0
        %621 = vmatpush2.bf16.msra.mxu0 0
        %622 = vmatprep.subr.bf16.mxu0 0
        %623 = vmatpush2.bf16.msra.mxu0 0
        %624 = vmatprep.subr.bf16.mxu0 0
        %625 = vmatpush2.bf16.msra.mxu0 0
        %626 = vmatprep.subr.bf16.mxu0 0
        %627 = vmatpush2.bf16.msra.mxu0 0
        %628 = vmatprep.subr.bf16.mxu0 0
        %629 = vmatpush2.bf16.msra.mxu0 0
        %630 = vmatprep.subr.bf16.mxu0 0
        %631 = vmatpush2.bf16.msra.mxu0 0
        %632 = vmatprep.mubr.bf16.mxu0 0
        %633 = vmatmul.mubr.bf16.gmra.mxu0 %v544
        %v634 = vpop.f32.mrf.mxu0
        %v635 = vadd.f32 %v526, %v634
        %v636 = vpop.f32.mrf.mxu0
        %v637 = vpop.f32.mrf.mxu0
        %v638 = vadd.f32 %v526, %v637
        %v639 = vpop.f32.mrf.mxu0
        %640 = vmatprep.mubr.bf16.mxu0 0
        %641 = vmatmul.mubr.bf16.gmra.mxu0 %v545
        %v642 = vpop.f32.mrf.mxu0
        %v643 = vadd.f32 %v526, %v642
        %v644 = vpop.f32.mrf.mxu0
        %v645 = vpop.f32.mrf.mxu0
        %v646 = vadd.f32 %v526, %v645
        %v647 = vpop.f32.mrf.mxu0
        %648 = vmatprep.mubr.bf16.mxu0 0
        %649 = vmatmul.mubr.bf16.gmra.mxu0 %v546
        %v650 = vpop.f32.mrf.mxu0
        %v651 = vadd.f32 %v526, %v650
        %v652 = vpop.f32.mrf.mxu0
        %v653 = vpop.f32.mrf.mxu0
        %v654 = vadd.f32 %v526, %v653
        %v655 = vpop.f32.mrf.mxu0
        %656 = vmatprep.mubr.bf16.mxu0 0
        %657 = vmatmul.mubr.bf16.gmra.mxu0 %v547
        %v658 = vpop.f32.mrf.mxu0
        %v659 = vadd.f32 %v526, %v658
        %v660 = vpop.f32.mrf.mxu0
        %v661 = vpop.f32.mrf.mxu0
        %v662 = vadd.f32 %v526, %v661
        %v663 = vpop.f32.mrf.mxu0
        %664 = vdwg.mxu0
        %v665 = vxor.u32 %v635, 2147483648
        %v666 = vxor.u32 %v638, 2147483648
        %v667 = vxor.u32 %v643, 2147483648
        %v668 = vxor.u32 %v646, 2147483648
        %v669 = vxor.u32 %v651, 2147483648
        %v670 = vxor.u32 %v654, 2147483648
        %v671 = vxor.u32 %v659, 2147483648
        %v672 = vxor.u32 %v662, 2147483648
        %v673 = vmul.f32 %v665, 1.442695
        %v674 = vpow.pop %v673
        %v675 = vmul.f32 %v666, 1.442695
        %v676 = vpow.pop %v675
        %v677 = vmul.f32 %v667, 1.442695
        %v678 = vpow.pop %v677
        %v679 = vmul.f32 %v668, 1.442695
        %v680 = vpow.pop %v679
        %v681 = vmul.f32 %v669, 1.442695
        %v682 = vpow.pop %v681
        %v683 = vmul.f32 %v670, 1.442695
        %v684 = vpow.pop %v683
        %v685 = vmul.f32 %v671, 1.442695
        %v686 = vpow.pop %v685
        %v687 = vmul.f32 %v672, 1.442695
        %v688 = vpow.pop %v687
        %v689 = vadd.f32 %v674, 1.0
        %v690 = vadd.f32 %v676, 1.0
        %v691 = vadd.f32 %v678, 1.0
        %v692 = vadd.f32 %v680, 1.0
        %v693 = vadd.f32 %v682, 1.0
        %v694 = vadd.f32 %v684, 1.0
        %v695 = vadd.f32 %v686, 1.0
        %v696 = vadd.f32 %v688, 1.0
        %v697 = vrcp.pop %v689
        %v698 = vmul.f32 1.0, %v697
        %v699 = vrcp.pop %v690
        %v700 = vmul.f32 1.0, %v699
        %v701 = vrcp.pop %v691
        %v702 = vmul.f32 1.0, %v701
        %v703 = vrcp.pop %v692
        %v704 = vmul.f32 1.0, %v703
        %v705 = vrcp.pop %v693
        %v706 = vmul.f32 1.0, %v705
        %v707 = vrcp.pop %v694
        %v708 = vmul.f32 1.0, %v707
        %v709 = vrcp.pop %v695
        %v710 = vmul.f32 1.0, %v709
        %v711 = vrcp.pop %v696
        %v712 = vmul.f32 1.0, %v711
        %v713 = vmul.f32 %v635, %v698
        %v714 = vmul.f32 %v638, %v700
        %v715 = vmul.f32 %v643, %v702
        %v716 = vmul.f32 %v646, %v704
        %v717 = vmul.f32 %v651, %v706
        %v718 = vmul.f32 %v654, %v708
        %v719 = vmul.f32 %v659, %v710
        %v720 = vmul.f32 %v662, %v712
        %v721 = vpack.c.bf16 %v714, %v713
        %v722 = vpack.c.bf16 %v716, %v715
        %v723 = vpack.c.bf16 %v718, %v717
        %v724 = vpack.c.bf16 %v720, %v719
        %v725 = vld [vmem:[%s3] sm:$0xf]
        %v726 = vld [vmem:[%s3 + $0x4] sm:$0xf]
        %v727 = vld [vmem:[%s3 + $0x8] sm:$0xf]
        %v728 = vld [vmem:[%s3 + $0xc] sm:$0xf]
        %v729 = vld [vmem:[%s3 + $0x10] sm:$0xf]
        %v730 = vld [vmem:[%s3 + $0x14] sm:$0xf]
        %v731 = vld [vmem:[%s3 + $0x18] sm:$0xf]
        %v732 = vld [vmem:[%s3 + $0x1c] sm:$0xf]
        %v733 = vld [vmem:[%s4] sm:$0x1]
        %v735 = vlaneseq
        %v736 = vshrl.u32 %v735, 7
        %v737 = vsub.s32 0, %v736
        %v738 = vrot.slane %v733, %v737
        %744 = vrot.lane.b32.xlu0 %v721, 64
        %v745 = vpop.permute.xlu0 %744
        %746 = vrot.lane.b32.xlu0 %v722, 64
        %v747 = vpop.permute.xlu0 %746
        %748 = vrot.lane.b32.xlu0 %v723, 64
        %v749 = vpop.permute.xlu0 %748
        %750 = vrot.lane.b32.xlu0 %v724, 64
        %v751 = vpop.permute.xlu0 %750
        %v760 = vunpack.c.l.b16 %v725
        %v761 = vunpack.c.l.b16 %v726
        %v762 = vunpack.c.l.b16 %v727
        %v763 = vunpack.c.l.b16 %v728
        %v764 = vunpack.c.l.b16 %v729
        %v765 = vunpack.c.l.b16 %v730
        %v766 = vunpack.c.l.b16 %v731
        %v767 = vunpack.c.l.b16 %v732
        %v768 = vpack.c.b16 %v761, %v760
        %v769 = vpack.c.b16 %v763, %v762
        %v770 = vpack.c.b16 %v765, %v764
        %v771 = vpack.c.b16 %v767, %v766
        %vm776 = vcmask 523264
        %v778 = vsel %vm776, %v745, 0
        %v781 = vsel %vm776, %v747, 0
        %v784 = vsel %vm776, %v749, 0
        %v787 = vsel %vm776, %v751, 0
        %789 = vmatprep.subr.bf16.mxu0 0
        %790 = vmatpush1.bf16.msra.mxu0 0
        %791 = vmatprep.subr.bf16.mxu0 0
        %792 = vmatpush1.bf16.msra.mxu0 0
        %793 = vmatprep.subr.bf16.mxu0 0
        %794 = vmatpush1.bf16.msra.mxu0 0
        %795 = vmatprep.subr.bf16.mxu0 0
        %796 = vmatpush1.bf16.msra.mxu0 0
        %797 = vmatprep.subr.bf16.mxu0 0
        %798 = vmatpush1.bf16.msra.mxu0 %v771
        %799 = vmatprep.subr.bf16.mxu0 0
        %800 = vmatpush1.bf16.msra.mxu0 %v770
        %801 = vmatprep.subr.bf16.mxu0 0
        %802 = vmatpush1.bf16.msra.mxu0 %v769
        %803 = vmatprep.subr.bf16.mxu0 0
        %804 = vmatpush1.bf16.msra.mxu0 %v768
        %805 = vmatprep.subr.bf16.mxu0 0
        %806 = vmatpush2.bf16.msra.mxu0 0
        %807 = vmatprep.subr.bf16.mxu0 0
        %808 = vmatpush2.bf16.msra.mxu0 0
        %809 = vmatprep.subr.bf16.mxu0 0
        %810 = vmatpush2.bf16.msra.mxu0 0
        %811 = vmatprep.subr.bf16.mxu0 0
        %812 = vmatpush2.bf16.msra.mxu0 0
        %813 = vmatprep.subr.bf16.mxu0 0
        %814 = vmatpush2.bf16.msra.mxu0 0
        %815 = vmatprep.subr.bf16.mxu0 0
        %816 = vmatpush2.bf16.msra.mxu0 0
        %817 = vmatprep.subr.bf16.mxu0 0
        %818 = vmatpush2.bf16.msra.mxu0 0
        %819 = vmatprep.subr.bf16.mxu0 0
        %820 = vmatpush2.bf16.msra.mxu0 0
        %821 = vmatprep.mubr.bf16.mxu0 0
        %822 = vmatmul.mubr.bf16.gmra.mxu0 %v778
        %v823 = vpop.f32.mrf.mxu0
        %v824 = vadd.f32 %v738, %v823
        %v825 = vpop.f32.mrf.mxu0
        %v826 = vpop.f32.mrf.mxu0
        %v827 = vadd.f32 %v738, %v826
        %v828 = vpop.f32.mrf.mxu0
        %829 = vmatprep.mubr.bf16.mxu0 0
        %830 = vmatmul.mubr.bf16.gmra.mxu0 %v781
        %v831 = vpop.f32.mrf.mxu0
        %v832 = vadd.f32 %v738, %v831
        %v833 = vpop.f32.mrf.mxu0
        %v834 = vpop.f32.mrf.mxu0
        %v835 = vadd.f32 %v738, %v834
        %v836 = vpop.f32.mrf.mxu0
        %837 = vmatprep.mubr.bf16.mxu0 0
        %838 = vmatmul.mubr.bf16.gmra.mxu0 %v784
        %v839 = vpop.f32.mrf.mxu0
        %v840 = vadd.f32 %v738, %v839
        %v841 = vpop.f32.mrf.mxu0
        %v842 = vpop.f32.mrf.mxu0
        %v843 = vadd.f32 %v738, %v842
        %v844 = vpop.f32.mrf.mxu0
        %845 = vmatprep.mubr.bf16.mxu0 0
        %846 = vmatmul.mubr.bf16.gmra.mxu0 %v787
        %v847 = vpop.f32.mrf.mxu0
        %v848 = vadd.f32 %v738, %v847
        %v849 = vpop.f32.mrf.mxu0
        %v850 = vpop.f32.mrf.mxu0
        %v851 = vadd.f32 %v738, %v850
        %v852 = vpop.f32.mrf.mxu0
        %853 = vdwg.mxu0
        %v854 = vpack.c.bf16 %v827, %v824
        %v855 = vpack.c.bf16 %v835, %v832
        %v856 = vpack.c.bf16 %v843, %v840
        %v857 = vpack.c.bf16 %v851, %v848
        %862 = vrot.lane.b32.xlu0 %v854, 96
        %v863 = vpop.permute.xlu0 %862
        %864 = vrot.lane.b32.xlu0 %v855, 96
        %v865 = vpop.permute.xlu0 %864
        %866 = vrot.lane.b32.xlu0 %v856, 96
        %v867 = vpop.permute.xlu0 %866
        %868 = vrot.lane.b32.xlu0 %v857, 96
        %v869 = vpop.permute.xlu0 %868
        %vm870 = vcmask 261120
        %v872 = vsel %vm870, %v854, 0
        %v875 = vsel %vm870, %v855, 0
        %v878 = vsel %vm870, %v856, 0
        %v881 = vsel %vm870, %v857, 0
        %v884 = vsel %vm870, %v863, 0
        %v887 = vsel %vm870, %v865, 0
        %v890 = vsel %vm870, %v867, 0
        %v893 = vsel %vm870, %v869, 0
        %895 = vmatprep.subr.bf16.mxu0 0
        %896 = vmatpush1.bf16.xpose.msra.mxu0 0
        %897 = vmatprep.subr.bf16.mxu0 0
        %898 = vmatpush1.bf16.xpose.msra.mxu0 0
        %899 = vmatprep.subr.bf16.mxu0 0
        %900 = vmatpush1.bf16.xpose.msra.mxu0 0
        %901 = vmatprep.subr.bf16.mxu0 0
        %902 = vmatpush1.bf16.xpose.msra.mxu0 0
        %903 = vmatprep.subr.bf16.mxu0 0
        %904 = vmatpush1.bf16.xpose.msra.mxu0 %v893
        %905 = vmatprep.subr.bf16.mxu0 0
        %906 = vmatpush1.bf16.xpose.msra.mxu0 %v890
        %907 = vmatprep.subr.bf16.mxu0 0
        %908 = vmatpush1.bf16.xpose.msra.mxu0 %v887
        %909 = vmatprep.subr.bf16.mxu0 0
        %910 = vmatpush1.bf16.xpose.msra.mxu0 %v884
        %911 = vmatprep.subr.bf16.mxu0 0
        %912 = vmatpush2.bf16.xpose.msra.mxu0 0
        %913 = vmatprep.subr.bf16.mxu0 0
        %914 = vmatpush2.bf16.xpose.msra.mxu0 0
        %915 = vmatprep.subr.bf16.mxu0 0
        %916 = vmatpush2.bf16.xpose.msra.mxu0 0
        %917 = vmatprep.subr.bf16.mxu0 0
        %918 = vmatpush2.bf16.xpose.msra.mxu0 0
        %919 = vmatprep.subr.bf16.mxu0 0
        %920 = vmatpush2.bf16.xpose.msra.mxu0 0
        %921 = vmatprep.subr.bf16.mxu0 0
        %922 = vmatpush2.bf16.xpose.msra.mxu0 0
        %923 = vmatprep.subr.bf16.mxu0 0
        %924 = vmatpush2.bf16.xpose.msra.mxu0 0
        %925 = vmatprep.subr.bf16.mxu0 0
        %926 = vmatpush2.bf16.xpose.msra.mxu0 0
        %927 = vmatprep.mubr.bf16.mxu0 0
        %928 = vmatmul.mubr.bf16.gmra.mxu0 %v872
        %v929 = vpop.f32.mrf.mxu0
        %v930 = vadd.f32 0.0, %v929
        %v931 = vpop.f32.mrf.mxu0
        %v932 = vpop.f32.mrf.mxu0
        %v933 = vadd.f32 0.0, %v932
        %v934 = vpop.f32.mrf.mxu0
        %935 = vmatprep.mubr.bf16.mxu0 0
        %936 = vmatmul.mubr.bf16.gmra.mxu0 %v875
        %v937 = vpop.f32.mrf.mxu0
        %v938 = vadd.f32 0.0, %v937
        %v939 = vpop.f32.mrf.mxu0
        %v940 = vpop.f32.mrf.mxu0
        %v941 = vadd.f32 0.0, %v940
        %v942 = vpop.f32.mrf.mxu0
        %943 = vmatprep.mubr.bf16.mxu0 0
        %944 = vmatmul.mubr.bf16.gmra.mxu0 %v878
        %v945 = vpop.f32.mrf.mxu0
        %v946 = vadd.f32 0.0, %v945
        %v947 = vpop.f32.mrf.mxu0
        %v948 = vpop.f32.mrf.mxu0
        %v949 = vadd.f32 0.0, %v948
        %v950 = vpop.f32.mrf.mxu0
        %951 = vmatprep.mubr.bf16.mxu0 0
        %952 = vmatmul.mubr.bf16.gmra.mxu0 %v881
        %v953 = vpop.f32.mrf.mxu0
        %v954 = vadd.f32 0.0, %v953
        %v955 = vpop.f32.mrf.mxu0
        %v956 = vpop.f32.mrf.mxu0
        %v957 = vadd.f32 0.0, %v956
        %v958 = vpop.f32.mrf.mxu0
        %959 = vdwg.mxu0
        %v960 = vsel %vm776, %v930, -inf
        %961 = vmax.xlane.f32.xlu0 %v960
        %v962 = vpop.xlane.xlu0 %961
        %v963 = vsel %vm776, %v933, -inf
        %964 = vmax.xlane.f32.xlu0 %v963
        %v965 = vpop.xlane.xlu0 %964
        %v966 = vsel %vm776, %v938, -inf
        %967 = vmax.xlane.f32.xlu0 %v966
        %v968 = vpop.xlane.xlu0 %967
        %v969 = vsel %vm776, %v941, -inf
        %970 = vmax.xlane.f32.xlu0 %v969
        %v971 = vpop.xlane.xlu0 %970
        %v972 = vsel %vm776, %v946, -inf
        %973 = vmax.xlane.f32.xlu0 %v972
        %v974 = vpop.xlane.xlu0 %973
        %v975 = vsel %vm776, %v949, -inf
        %976 = vmax.xlane.f32.xlu0 %v975
        %v977 = vpop.xlane.xlu0 %976
        %v978 = vsel %vm776, %v954, -inf
        %979 = vmax.xlane.f32.xlu0 %v978
        %v980 = vpop.xlane.xlu0 %979
        %v981 = vsel %vm776, %v957, -inf
        %982 = vmax.xlane.f32.xlu0 %v981
        %v983 = vpop.xlane.xlu0 %982
        %v984 = vsub.f32 %v930, %v962
        %v985 = vsub.f32 %v933, %v965
        %v986 = vsub.f32 %v938, %v968
        %v987 = vsub.f32 %v941, %v971
        %v988 = vsub.f32 %v946, %v974
        %v989 = vsub.f32 %v949, %v977
        %v990 = vsub.f32 %v954, %v980
        %v991 = vsub.f32 %v957, %v983
        %v992 = vmul.f32 %v984, 1.442695
        %v993 = vpow.pop %v992
        %v994 = vmul.f32 %v985, 1.442695
        %v995 = vpow.pop %v994
        %v996 = vmul.f32 %v986, 1.442695
        %v997 = vpow.pop %v996
        %v998 = vmul.f32 %v987, 1.442695
        %v999 = vpow.pop %v998
        %v1000 = vmul.f32 %v988, 1.442695
        %v1001 = vpow.pop %v1000
        %v1002 = vmul.f32 %v989, 1.442695
        %v1003 = vpow.pop %v1002
        %v1004 = vmul.f32 %v990, 1.442695
        %v1005 = vpow.pop %v1004
        %v1006 = vmul.f32 %v991, 1.442695
        %v1007 = vpow.pop %v1006
        %v1008 = vsel %vm776, %v993, 0.0
        %1009 = vadd.xlane.f32.xlu0 %v1008
        %v1010 = vpop.xlane.xlu0 %1009
        %v1011 = vsel %vm776, %v995, 0.0
        %1012 = vadd.xlane.f32.xlu0 %v1011
        %v1013 = vpop.xlane.xlu0 %1012
        %v1014 = vsel %vm776, %v997, 0.0
        %1015 = vadd.xlane.f32.xlu0 %v1014
        %v1016 = vpop.xlane.xlu0 %1015
        %v1017 = vsel %vm776, %v999, 0.0
        %1018 = vadd.xlane.f32.xlu0 %v1017
        %v1019 = vpop.xlane.xlu0 %1018
        %v1020 = vsel %vm776, %v1001, 0.0
        %1021 = vadd.xlane.f32.xlu0 %v1020
        %v1022 = vpop.xlane.xlu0 %1021
        %v1023 = vsel %vm776, %v1003, 0.0
        %1024 = vadd.xlane.f32.xlu0 %v1023
        %v1025 = vpop.xlane.xlu0 %1024
        %v1026 = vsel %vm776, %v1005, 0.0
        %1027 = vadd.xlane.f32.xlu0 %v1026
        %v1028 = vpop.xlane.xlu0 %1027
        %v1029 = vsel %vm776, %v1007, 0.0
        %1030 = vadd.xlane.f32.xlu0 %v1029
        %v1031 = vpop.xlane.xlu0 %1030
        %v1032 = vpack.c.bf16 %v995, %v993
        %v1033 = vpack.c.bf16 %v999, %v997
        %v1034 = vpack.c.bf16 %v1003, %v1001
        %v1035 = vpack.c.bf16 %v1007, %v1005
        %1036 = vrot.lane.b32.xlu0 %v854, 64
        %v1037 = vpop.permute.xlu0 %1036
        %1038 = vrot.lane.b32.xlu0 %v855, 64
        %v1039 = vpop.permute.xlu0 %1038
        %1040 = vrot.lane.b32.xlu0 %v856, 64
        %v1041 = vpop.permute.xlu0 %1040
        %1042 = vrot.lane.b32.xlu0 %v857, 64
        %v1043 = vpop.permute.xlu0 %1042
        %v1049 = vsel %vm776, %v1032, 0
        %v1052 = vsel %vm776, %v1033, 0
        %v1055 = vsel %vm776, %v1034, 0
        %v1058 = vsel %vm776, %v1035, 0
        %1060 = vmatprep.subr.bf16.mxu0 0
        %1061 = vmatpush1.bf16.msra.mxu0 0
        %1062 = vmatprep.subr.bf16.mxu0 0
        %1063 = vmatpush1.bf16.msra.mxu0 0
        %1064 = vmatprep.subr.bf16.mxu0 0
        %1065 = vmatpush1.bf16.msra.mxu0 0
        %1066 = vmatprep.subr.bf16.mxu0 0
        %1067 = vmatpush1.bf16.msra.mxu0 0
        %1068 = vmatprep.subr.bf16.mxu0 0
        %1069 = vmatpush1.bf16.msra.mxu0 %v1043
        %1070 = vmatprep.subr.bf16.mxu0 0
        %1071 = vmatpush1.bf16.msra.mxu0 %v1041
        %1072 = vmatprep.subr.bf16.mxu0 0
        %1073 = vmatpush1.bf16.msra.mxu0 %v1039
        %1074 = vmatprep.subr.bf16.mxu0 0
        %1075 = vmatpush1.bf16.msra.mxu0 %v1037
        %1076 = vmatprep.subr.bf16.mxu0 0
        %1077 = vmatpush2.bf16.msra.mxu0 0
        %1078 = vmatprep.subr.bf16.mxu0 0
        %1079 = vmatpush2.bf16.msra.mxu0 0
        %1080 = vmatprep.subr.bf16.mxu0 0
        %1081 = vmatpush2.bf16.msra.mxu0 0
        %1082 = vmatprep.subr.bf16.mxu0 0
        %1083 = vmatpush2.bf16.msra.mxu0 0
        %1084 = vmatprep.subr.bf16.mxu0 0
        %1085 = vmatpush2.bf16.msra.mxu0 0
        %1086 = vmatprep.subr.bf16.mxu0 0
        %1087 = vmatpush2.bf16.msra.mxu0 0
        %1088 = vmatprep.subr.bf16.mxu0 0
        %1089 = vmatpush2.bf16.msra.mxu0 0
        %1090 = vmatprep.subr.bf16.mxu0 0
        %1091 = vmatpush2.bf16.msra.mxu0 0
        %1092 = vmatprep.mubr.bf16.mxu0 0
        %1093 = vmatmul.mubr.bf16.gmra.mxu0 %v1049
        %v1094 = vpop.f32.mrf.mxu0
        %v1095 = vadd.f32 0.0, %v1094
        %v1096 = vpop.f32.mrf.mxu0
        %v1097 = vpop.f32.mrf.mxu0
        %v1098 = vadd.f32 0.0, %v1097
        %v1099 = vpop.f32.mrf.mxu0
        %1100 = vmatprep.mubr.bf16.mxu0 0
        %1101 = vmatmul.mubr.bf16.gmra.mxu0 %v1052
        %v1102 = vpop.f32.mrf.mxu0
        %v1103 = vadd.f32 0.0, %v1102
        %v1104 = vpop.f32.mrf.mxu0
        %v1105 = vpop.f32.mrf.mxu0
        %v1106 = vadd.f32 0.0, %v1105
        %v1107 = vpop.f32.mrf.mxu0
        %1108 = vmatprep.mubr.bf16.mxu0 0
        %1109 = vmatmul.mubr.bf16.gmra.mxu0 %v1055
        %v1110 = vpop.f32.mrf.mxu0
        %v1111 = vadd.f32 0.0, %v1110
        %v1112 = vpop.f32.mrf.mxu0
        %v1113 = vpop.f32.mrf.mxu0
        %v1114 = vadd.f32 0.0, %v1113
        %v1115 = vpop.f32.mrf.mxu0
        %1116 = vmatprep.mubr.bf16.mxu0 0
        %1117 = vmatmul.mubr.bf16.gmra.mxu0 %v1058
        %v1118 = vpop.f32.mrf.mxu0
        %v1119 = vadd.f32 0.0, %v1118
        %v1120 = vpop.f32.mrf.mxu0
        %v1121 = vpop.f32.mrf.mxu0
        %v1122 = vadd.f32 0.0, %v1121
        %v1123 = vpop.f32.mrf.mxu0
        %1124 = vdwg.mxu0
        %v1125 = vrcp.pop %v1010
        %v1126 = vrcp.pop %v1013
        %v1127 = vrcp.pop %v1016
        %v1128 = vrcp.pop %v1019
        %v1129 = vrcp.pop %v1022
        %v1130 = vrcp.pop %v1025
        %v1131 = vrcp.pop %v1028
        %v1132 = vrcp.pop %v1031
        %v1133 = vmul.f32 %v1095, %v1125
        %v1134 = vmul.f32 %v1098, %v1126
        %v1135 = vmul.f32 %v1103, %v1127
        %v1136 = vmul.f32 %v1106, %v1128
        %v1137 = vmul.f32 %v1111, %v1129
        %v1138 = vmul.f32 %v1114, %v1130
        %v1139 = vmul.f32 %v1119, %v1131
        %v1140 = vmul.f32 %v1122, %v1132
        %s1141 = scalar_lea.vmem %s5, 256
        %v1142 = vld [vmem:[%s1141] sm:$0xff]
        %v1143 = vld [vmem:[%s1141 + $0x8] sm:$0xff]
        %v1144 = vld [vmem:[%s1141 + $0x10] sm:$0xff]
        %v1145 = vld [vmem:[%s1141 + $0x18] sm:$0xff]
        %v1146 = vld [vmem:[%s1141 + $0x20] sm:$0xff]
        %v1147 = vld [vmem:[%s1141 + $0x28] sm:$0xff]
        %v1148 = vld [vmem:[%s1141 + $0x30] sm:$0xff]
        %v1149 = vld [vmem:[%s1141 + $0x38] sm:$0xff]
        %1158 = vrot.lane.b32.xlu0 %v1142, 64
        %v1159 = vpop.permute.xlu0 %1158
        %1160 = vrot.lane.b32.xlu0 %v1143, 64
        %v1161 = vpop.permute.xlu0 %1160
        %1162 = vrot.lane.b32.xlu0 %v1144, 64
        %v1163 = vpop.permute.xlu0 %1162
        %1164 = vrot.lane.b32.xlu0 %v1145, 64
        %v1165 = vpop.permute.xlu0 %1164
        %1166 = vrot.lane.b32.xlu0 %v1146, 64
        %v1167 = vpop.permute.xlu0 %1166
        %1168 = vrot.lane.b32.xlu0 %v1147, 64
        %v1169 = vpop.permute.xlu0 %1168
        %1170 = vrot.lane.b32.xlu0 %v1148, 64
        %v1171 = vpop.permute.xlu0 %1170
        %1172 = vrot.lane.b32.xlu0 %v1149, 64
        %v1173 = vpop.permute.xlu0 %1172
        %v1182 = vmul.f32 %v824, %v1159
        %v1183 = vmul.f32 %v827, %v1161
        %v1184 = vmul.f32 %v832, %v1163
        %v1185 = vmul.f32 %v835, %v1165
        %v1186 = vmul.f32 %v840, %v1167
        %v1187 = vmul.f32 %v843, %v1169
        %v1188 = vmul.f32 %v848, %v1171
        %v1189 = vmul.f32 %v851, %v1173
        %1198 = vrot.lane.b32.xlu0 %v824, 64
        %v1199 = vpop.permute.xlu0 %1198
        %1200 = vrot.lane.b32.xlu0 %v827, 64
        %v1201 = vpop.permute.xlu0 %1200
        %1202 = vrot.lane.b32.xlu0 %v832, 64
        %v1203 = vpop.permute.xlu0 %1202
        %1204 = vrot.lane.b32.xlu0 %v835, 64
        %v1205 = vpop.permute.xlu0 %1204
        %1206 = vrot.lane.b32.xlu0 %v840, 64
        %v1207 = vpop.permute.xlu0 %1206
        %1208 = vrot.lane.b32.xlu0 %v843, 64
        %v1209 = vpop.permute.xlu0 %1208
        %1210 = vrot.lane.b32.xlu0 %v848, 64
        %v1211 = vpop.permute.xlu0 %1210
        %1212 = vrot.lane.b32.xlu0 %v851, 64
        %v1213 = vpop.permute.xlu0 %1212
        %v1222 = vrot.slane %v1199, 7
        %v1223 = vrot.slane %v1201, 7
        %v1224 = vrot.slane %v1203, 7
        %v1225 = vrot.slane %v1205, 7
        %v1226 = vrot.slane %v1207, 7
        %v1227 = vrot.slane %v1209, 7
        %v1228 = vrot.slane %v1211, 7
        %v1229 = vrot.slane %v1213, 7
        %v1230 = vlaneseq
        %v1231 = vshrl.u32 %v1230, 7
        %vm1232 = vcmp.lt.s32.totalorder %v1231, 1
        %v1233 = vsel %vm1232, %v1228, %v1229
        %v1234 = vsel %vm1232, %v1227, %v1228
        %v1235 = vsel %vm1232, %v1226, %v1227
        %v1236 = vsel %vm1232, %v1225, %v1226
        %v1237 = vsel %vm1232, %v1224, %v1225
        %v1238 = vsel %vm1232, %v1223, %v1224
        %v1239 = vsel %vm1232, %v1222, %v1223
        %v1240 = vsel %vm1232, %v1229, %v1222
        %v1241 = vld [vmem:[%s5] sm:$0xff]
        %v1242 = vld [vmem:[%s5 + $0x8] sm:$0xff]
        %v1243 = vld [vmem:[%s5 + $0x10] sm:$0xff]
        %v1244 = vld [vmem:[%s5 + $0x18] sm:$0xff]
        %v1245 = vld [vmem:[%s5 + $0x20] sm:$0xff]
        %v1246 = vld [vmem:[%s5 + $0x28] sm:$0xff]
        %v1247 = vld [vmem:[%s5 + $0x30] sm:$0xff]
        %v1248 = vld [vmem:[%s5 + $0x38] sm:$0xff]
        %v1249 = vmul.f32 %v1233, %v1241
        %v1250 = vmul.f32 %v1240, %v1242
        %v1251 = vmul.f32 %v1239, %v1243
        %v1252 = vmul.f32 %v1238, %v1244
        %v1253 = vmul.f32 %v1237, %v1245
        %v1254 = vmul.f32 %v1236, %v1246
        %v1255 = vmul.f32 %v1235, %v1247
        %v1256 = vmul.f32 %v1234, %v1248
        %1265 = vrot.lane.b32.xlu0 %v1249, 64
        %v1266 = vpop.permute.xlu0 %1265
        %1267 = vrot.lane.b32.xlu0 %v1250, 64
        %v1268 = vpop.permute.xlu0 %1267
        %1269 = vrot.lane.b32.xlu0 %v1251, 64
        %v1270 = vpop.permute.xlu0 %1269
        %1271 = vrot.lane.b32.xlu0 %v1252, 64
        %v1272 = vpop.permute.xlu0 %1271
        %1273 = vrot.lane.b32.xlu0 %v1253, 64
        %v1274 = vpop.permute.xlu0 %1273
        %1275 = vrot.lane.b32.xlu0 %v1254, 64
        %v1276 = vpop.permute.xlu0 %1275
        %1277 = vrot.lane.b32.xlu0 %v1255, 64
        %v1278 = vpop.permute.xlu0 %1277
        %1279 = vrot.lane.b32.xlu0 %v1256, 64
        %v1280 = vpop.permute.xlu0 %1279
        %v1289 = vadd.f32 %v1182, %v1266
        %v1290 = vadd.f32 %v1183, %v1268
        %v1291 = vadd.f32 %v1184, %v1270
        %v1292 = vadd.f32 %v1185, %v1272
        %v1293 = vadd.f32 %v1186, %v1274
        %v1294 = vadd.f32 %v1187, %v1276
        %v1295 = vadd.f32 %v1188, %v1278
        %v1296 = vadd.f32 %v1189, %v1280
        %s1297 = scalar_lea.vmem %s5, 64
        %v1298 = vld [vmem:[%s1297] sm:$0xff]
        %v1299 = vld [vmem:[%s1297 + $0x8] sm:$0xff]
        %v1300 = vld [vmem:[%s1297 + $0x10] sm:$0xff]
        %v1301 = vld [vmem:[%s1297 + $0x18] sm:$0xff]
        %v1302 = vld [vmem:[%s1297 + $0x20] sm:$0xff]
        %v1303 = vld [vmem:[%s1297 + $0x28] sm:$0xff]
        %v1304 = vld [vmem:[%s1297 + $0x30] sm:$0xff]
        %v1305 = vld [vmem:[%s1297 + $0x38] sm:$0xff]
        %v1306 = vmul.f32 %v1213, %v1298
        %v1307 = vmul.f32 %v1199, %v1299
        %v1308 = vmul.f32 %v1201, %v1300
        %v1309 = vmul.f32 %v1203, %v1301
        %v1310 = vmul.f32 %v1205, %v1302
        %v1311 = vmul.f32 %v1207, %v1303
        %v1312 = vmul.f32 %v1209, %v1304
        %v1313 = vmul.f32 %v1211, %v1305
        %1322 = vrot.lane.b32.xlu0 %v1306, 64
        %v1323 = vpop.permute.xlu0 %1322
        %1324 = vrot.lane.b32.xlu0 %v1307, 64
        %v1325 = vpop.permute.xlu0 %1324
        %1326 = vrot.lane.b32.xlu0 %v1308, 64
        %v1327 = vpop.permute.xlu0 %1326
        %1328 = vrot.lane.b32.xlu0 %v1309, 64
        %v1329 = vpop.permute.xlu0 %1328
        %1330 = vrot.lane.b32.xlu0 %v1310, 64
        %v1331 = vpop.permute.xlu0 %1330
        %1332 = vrot.lane.b32.xlu0 %v1311, 64
        %v1333 = vpop.permute.xlu0 %1332
        %1334 = vrot.lane.b32.xlu0 %v1312, 64
        %v1335 = vpop.permute.xlu0 %1334
        %1336 = vrot.lane.b32.xlu0 %v1313, 64
        %v1337 = vpop.permute.xlu0 %1336
        %v1346 = vadd.f32 %v1289, %v1323
        %v1347 = vadd.f32 %v1290, %v1325
        %v1348 = vadd.f32 %v1291, %v1327
        %v1349 = vadd.f32 %v1292, %v1329
        %v1350 = vadd.f32 %v1293, %v1331
        %v1351 = vadd.f32 %v1294, %v1333
        %v1352 = vadd.f32 %v1295, %v1335
        %v1353 = vadd.f32 %v1296, %v1337
        %v1354 = vrot.slane %v1199, 1
        %v1355 = vrot.slane %v1201, 1
        %v1356 = vrot.slane %v1203, 1
        %v1357 = vrot.slane %v1205, 1
        %v1358 = vrot.slane %v1207, 1
        %v1359 = vrot.slane %v1209, 1
        %v1360 = vrot.slane %v1211, 1
        %v1361 = vrot.slane %v1213, 1
        %vm1362 = vcmp.lt.s32.totalorder %v1231, 7
        %v1363 = vsel %vm1362, %v1360, %v1361
        %v1364 = vsel %vm1362, %v1359, %v1360
        %v1365 = vsel %vm1362, %v1358, %v1359
        %v1366 = vsel %vm1362, %v1357, %v1358
        %v1367 = vsel %vm1362, %v1356, %v1357
        %v1368 = vsel %vm1362, %v1355, %v1356
        %v1369 = vsel %vm1362, %v1354, %v1355
        %v1370 = vsel %vm1362, %v1361, %v1354
        %s1371 = scalar_lea.vmem %s5, 128
        %v1372 = vld [vmem:[%s1371] sm:$0xff]
        %v1373 = vld [vmem:[%s1371 + $0x8] sm:$0xff]
        %v1374 = vld [vmem:[%s1371 + $0x10] sm:$0xff]
        %v1375 = vld [vmem:[%s1371 + $0x18] sm:$0xff]
        %v1376 = vld [vmem:[%s1371 + $0x20] sm:$0xff]
        %v1377 = vld [vmem:[%s1371 + $0x28] sm:$0xff]
        %v1378 = vld [vmem:[%s1371 + $0x30] sm:$0xff]
        %v1379 = vld [vmem:[%s1371 + $0x38] sm:$0xff]
        %v1380 = vmul.f32 %v1370, %v1372
        %v1381 = vmul.f32 %v1369, %v1373
        %v1382 = vmul.f32 %v1368, %v1374
        %v1383 = vmul.f32 %v1367, %v1375
        %v1384 = vmul.f32 %v1366, %v1376
        %v1385 = vmul.f32 %v1365, %v1377
        %v1386 = vmul.f32 %v1364, %v1378
        %v1387 = vmul.f32 %v1363, %v1379
        %1396 = vrot.lane.b32.xlu0 %v1380, 64
        %v1397 = vpop.permute.xlu0 %1396
        %1398 = vrot.lane.b32.xlu0 %v1381, 64
        %v1399 = vpop.permute.xlu0 %1398
        %1400 = vrot.lane.b32.xlu0 %v1382, 64
        %v1401 = vpop.permute.xlu0 %1400
        %1402 = vrot.lane.b32.xlu0 %v1383, 64
        %v1403 = vpop.permute.xlu0 %1402
        %1404 = vrot.lane.b32.xlu0 %v1384, 64
        %v1405 = vpop.permute.xlu0 %1404
        %1406 = vrot.lane.b32.xlu0 %v1385, 64
        %v1407 = vpop.permute.xlu0 %1406
        %1408 = vrot.lane.b32.xlu0 %v1386, 64
        %v1409 = vpop.permute.xlu0 %1408
        %1410 = vrot.lane.b32.xlu0 %v1387, 64
        %v1411 = vpop.permute.xlu0 %1410
        %v1420 = vadd.f32 %v1346, %v1397
        %v1421 = vadd.f32 %v1347, %v1399
        %v1422 = vadd.f32 %v1348, %v1401
        %v1423 = vadd.f32 %v1349, %v1403
        %v1424 = vadd.f32 %v1350, %v1405
        %v1425 = vadd.f32 %v1351, %v1407
        %v1426 = vadd.f32 %v1352, %v1409
        %v1427 = vadd.f32 %v1353, %v1411
        %s1428 = scalar_lea.vmem %s5, 192
        %v1429 = vld [vmem:[%s1428] sm:$0xff]
        %v1430 = vld [vmem:[%s1428 + $0x8] sm:$0xff]
        %v1431 = vld [vmem:[%s1428 + $0x10] sm:$0xff]
        %v1432 = vld [vmem:[%s1428 + $0x18] sm:$0xff]
        %v1433 = vld [vmem:[%s1428 + $0x20] sm:$0xff]
        %v1434 = vld [vmem:[%s1428 + $0x28] sm:$0xff]
        %v1435 = vld [vmem:[%s1428 + $0x30] sm:$0xff]
        %v1436 = vld [vmem:[%s1428 + $0x38] sm:$0xff]
        %v1437 = vmul.f32 %v1240, %v1429
        %v1438 = vmul.f32 %v1239, %v1430
        %v1439 = vmul.f32 %v1238, %v1431
        %v1440 = vmul.f32 %v1237, %v1432
        %v1441 = vmul.f32 %v1236, %v1433
        %v1442 = vmul.f32 %v1235, %v1434
        %v1443 = vmul.f32 %v1234, %v1435
        %v1444 = vmul.f32 %v1233, %v1436
        %1453 = vrot.lane.b32.xlu0 %v1437, 64
        %v1454 = vpop.permute.xlu0 %1453
        %1455 = vrot.lane.b32.xlu0 %v1438, 64
        %v1456 = vpop.permute.xlu0 %1455
        %1457 = vrot.lane.b32.xlu0 %v1439, 64
        %v1458 = vpop.permute.xlu0 %1457
        %1459 = vrot.lane.b32.xlu0 %v1440, 64
        %v1460 = vpop.permute.xlu0 %1459
        %1461 = vrot.lane.b32.xlu0 %v1441, 64
        %v1462 = vpop.permute.xlu0 %1461
        %1463 = vrot.lane.b32.xlu0 %v1442, 64
        %v1464 = vpop.permute.xlu0 %1463
        %1465 = vrot.lane.b32.xlu0 %v1443, 64
        %v1466 = vpop.permute.xlu0 %1465
        %1467 = vrot.lane.b32.xlu0 %v1444, 64
        %v1468 = vpop.permute.xlu0 %1467
        %v1477 = vadd.f32 %v1420, %v1454
        %v1478 = vadd.f32 %v1421, %v1456
        %v1479 = vadd.f32 %v1422, %v1458
        %v1480 = vadd.f32 %v1423, %v1460
        %v1481 = vadd.f32 %v1424, %v1462
        %v1482 = vadd.f32 %v1425, %v1464
        %v1483 = vadd.f32 %v1426, %v1466
        %v1484 = vadd.f32 %v1427, %v1468
        %s1485 = scalar_lea.vmem %s5, 320
        %v1486 = vld [vmem:[%s1485] sm:$0xff]
        %v1487 = vld [vmem:[%s1485 + $0x8] sm:$0xff]
        %v1488 = vld [vmem:[%s1485 + $0x10] sm:$0xff]
        %v1489 = vld [vmem:[%s1485 + $0x18] sm:$0xff]
        %v1490 = vld [vmem:[%s1485 + $0x20] sm:$0xff]
        %v1491 = vld [vmem:[%s1485 + $0x28] sm:$0xff]
        %v1492 = vld [vmem:[%s1485 + $0x30] sm:$0xff]
        %v1493 = vld [vmem:[%s1485 + $0x38] sm:$0xff]
        %v1494 = vmul.f32 %v1369, %v1486
        %v1495 = vmul.f32 %v1368, %v1487
        %v1496 = vmul.f32 %v1367, %v1488
        %v1497 = vmul.f32 %v1366, %v1489
        %v1498 = vmul.f32 %v1365, %v1490
        %v1499 = vmul.f32 %v1364, %v1491
        %v1500 = vmul.f32 %v1363, %v1492
        %v1501 = vmul.f32 %v1370, %v1493
        %1510 = vrot.lane.b32.xlu0 %v1494, 64
        %v1511 = vpop.permute.xlu0 %1510
        %1512 = vrot.lane.b32.xlu0 %v1495, 64
        %v1513 = vpop.permute.xlu0 %1512
        %1514 = vrot.lane.b32.xlu0 %v1496, 64
        %v1515 = vpop.permute.xlu0 %1514
        %1516 = vrot.lane.b32.xlu0 %v1497, 64
        %v1517 = vpop.permute.xlu0 %1516
        %1518 = vrot.lane.b32.xlu0 %v1498, 64
        %v1519 = vpop.permute.xlu0 %1518
        %1520 = vrot.lane.b32.xlu0 %v1499, 64
        %v1521 = vpop.permute.xlu0 %1520
        %1522 = vrot.lane.b32.xlu0 %v1500, 64
        %v1523 = vpop.permute.xlu0 %1522
        %1524 = vrot.lane.b32.xlu0 %v1501, 64
        %v1525 = vpop.permute.xlu0 %1524
        %v1534 = vadd.f32 %v1477, %v1511
        %v1535 = vadd.f32 %v1478, %v1513
        %v1536 = vadd.f32 %v1479, %v1515
        %v1537 = vadd.f32 %v1480, %v1517
        %v1538 = vadd.f32 %v1481, %v1519
        %v1539 = vadd.f32 %v1482, %v1521
        %v1540 = vadd.f32 %v1483, %v1523
        %v1541 = vadd.f32 %v1484, %v1525
        %s1542 = scalar_lea.vmem %s5, 384
        %v1543 = vld [vmem:[%s1542] sm:$0xff]
        %v1544 = vld [vmem:[%s1542 + $0x8] sm:$0xff]
        %v1545 = vld [vmem:[%s1542 + $0x10] sm:$0xff]
        %v1546 = vld [vmem:[%s1542 + $0x18] sm:$0xff]
        %v1547 = vld [vmem:[%s1542 + $0x20] sm:$0xff]
        %v1548 = vld [vmem:[%s1542 + $0x28] sm:$0xff]
        %v1549 = vld [vmem:[%s1542 + $0x30] sm:$0xff]
        %v1550 = vld [vmem:[%s1542 + $0x38] sm:$0xff]
        %v1551 = vmul.f32 %v1239, %v1543
        %v1552 = vmul.f32 %v1238, %v1544
        %v1553 = vmul.f32 %v1237, %v1545
        %v1554 = vmul.f32 %v1236, %v1546
        %v1555 = vmul.f32 %v1235, %v1547
        %v1556 = vmul.f32 %v1234, %v1548
        %v1557 = vmul.f32 %v1233, %v1549
        %v1558 = vmul.f32 %v1240, %v1550
        %1567 = vrot.lane.b32.xlu0 %v1551, 64
        %v1568 = vpop.permute.xlu0 %1567
        %1569 = vrot.lane.b32.xlu0 %v1552, 64
        %v1570 = vpop.permute.xlu0 %1569
        %1571 = vrot.lane.b32.xlu0 %v1553, 64
        %v1572 = vpop.permute.xlu0 %1571
        %1573 = vrot.lane.b32.xlu0 %v1554, 64
        %v1574 = vpop.permute.xlu0 %1573
        %1575 = vrot.lane.b32.xlu0 %v1555, 64
        %v1576 = vpop.permute.xlu0 %1575
        %1577 = vrot.lane.b32.xlu0 %v1556, 64
        %v1578 = vpop.permute.xlu0 %1577
        %1579 = vrot.lane.b32.xlu0 %v1557, 64
        %v1580 = vpop.permute.xlu0 %1579
        %1581 = vrot.lane.b32.xlu0 %v1558, 64
        %v1582 = vpop.permute.xlu0 %1581
        %v1591 = vadd.f32 %v1534, %v1568
        %v1592 = vadd.f32 %v1535, %v1570
        %v1593 = vadd.f32 %v1536, %v1572
        %v1594 = vadd.f32 %v1537, %v1574
        %v1595 = vadd.f32 %v1538, %v1576
        %v1596 = vadd.f32 %v1539, %v1578
        %v1597 = vadd.f32 %v1540, %v1580
        %v1598 = vadd.f32 %v1541, %v1582
        %s1599 = scalar_lea.vmem %s5, 448
        %v1600 = vld [vmem:[%s1599] sm:$0xff]
        %v1601 = vld [vmem:[%s1599 + $0x8] sm:$0xff]
        %v1602 = vld [vmem:[%s1599 + $0x10] sm:$0xff]
        %v1603 = vld [vmem:[%s1599 + $0x18] sm:$0xff]
        %v1604 = vld [vmem:[%s1599 + $0x20] sm:$0xff]
        %v1605 = vld [vmem:[%s1599 + $0x28] sm:$0xff]
        %v1606 = vld [vmem:[%s1599 + $0x30] sm:$0xff]
        %v1607 = vld [vmem:[%s1599 + $0x38] sm:$0xff]
        %v1608 = vmul.f32 %v1201, %v1600
        %v1609 = vmul.f32 %v1203, %v1601
        %v1610 = vmul.f32 %v1205, %v1602
        %v1611 = vmul.f32 %v1207, %v1603
        %v1612 = vmul.f32 %v1209, %v1604
        %v1613 = vmul.f32 %v1211, %v1605
        %v1614 = vmul.f32 %v1213, %v1606
        %v1615 = vmul.f32 %v1199, %v1607
        %1624 = vrot.lane.b32.xlu0 %v1608, 64
        %v1625 = vpop.permute.xlu0 %1624
        %1626 = vrot.lane.b32.xlu0 %v1609, 64
        %v1627 = vpop.permute.xlu0 %1626
        %1628 = vrot.lane.b32.xlu0 %v1610, 64
        %v1629 = vpop.permute.xlu0 %1628
        %1630 = vrot.lane.b32.xlu0 %v1611, 64
        %v1631 = vpop.permute.xlu0 %1630
        %1632 = vrot.lane.b32.xlu0 %v1612, 64
        %v1633 = vpop.permute.xlu0 %1632
        %1634 = vrot.lane.b32.xlu0 %v1613, 64
        %v1635 = vpop.permute.xlu0 %1634
        %1636 = vrot.lane.b32.xlu0 %v1614, 64
        %v1637 = vpop.permute.xlu0 %1636
        %1638 = vrot.lane.b32.xlu0 %v1615, 64
        %v1639 = vpop.permute.xlu0 %1638
        %v1648 = vadd.f32 %v1591, %v1625
        %v1649 = vadd.f32 %v1592, %v1627
        %v1650 = vadd.f32 %v1593, %v1629
        %v1651 = vadd.f32 %v1594, %v1631
        %v1652 = vadd.f32 %v1595, %v1633
        %v1653 = vadd.f32 %v1596, %v1635
        %v1654 = vadd.f32 %v1597, %v1637
        %v1655 = vadd.f32 %v1598, %v1639
        %s1656 = scalar_lea.vmem %s5, 512
        %v1657 = vld [vmem:[%s1656] sm:$0xff]
        %v1658 = vld [vmem:[%s1656 + $0x8] sm:$0xff]
        %v1659 = vld [vmem:[%s1656 + $0x10] sm:$0xff]
        %v1660 = vld [vmem:[%s1656 + $0x18] sm:$0xff]
        %v1661 = vld [vmem:[%s1656 + $0x20] sm:$0xff]
        %v1662 = vld [vmem:[%s1656 + $0x28] sm:$0xff]
        %v1663 = vld [vmem:[%s1656 + $0x30] sm:$0xff]
        %v1664 = vld [vmem:[%s1656 + $0x38] sm:$0xff]
        %v1665 = vmul.f32 %v1368, %v1657
        %v1666 = vmul.f32 %v1367, %v1658
        %v1667 = vmul.f32 %v1366, %v1659
        %v1668 = vmul.f32 %v1365, %v1660
        %v1669 = vmul.f32 %v1364, %v1661
        %v1670 = vmul.f32 %v1363, %v1662
        %v1671 = vmul.f32 %v1370, %v1663
        %v1672 = vmul.f32 %v1369, %v1664
        %1681 = vrot.lane.b32.xlu0 %v1665, 64
        %v1682 = vpop.permute.xlu0 %1681
        %1683 = vrot.lane.b32.xlu0 %v1666, 64
        %v1684 = vpop.permute.xlu0 %1683
        %1685 = vrot.lane.b32.xlu0 %v1667, 64
        %v1686 = vpop.permute.xlu0 %1685
        %1687 = vrot.lane.b32.xlu0 %v1668, 64
        %v1688 = vpop.permute.xlu0 %1687
        %1689 = vrot.lane.b32.xlu0 %v1669, 64
        %v1690 = vpop.permute.xlu0 %1689
        %1691 = vrot.lane.b32.xlu0 %v1670, 64
        %v1692 = vpop.permute.xlu0 %1691
        %1693 = vrot.lane.b32.xlu0 %v1671, 64
        %v1694 = vpop.permute.xlu0 %1693
        %1695 = vrot.lane.b32.xlu0 %v1672, 64
        %v1696 = vpop.permute.xlu0 %1695
        %v1705 = vadd.f32 %v1648, %v1682
        %v1706 = vadd.f32 %v1649, %v1684
        %v1707 = vadd.f32 %v1650, %v1686
        %v1708 = vadd.f32 %v1651, %v1688
        %v1709 = vadd.f32 %v1652, %v1690
        %v1710 = vadd.f32 %v1653, %v1692
        %v1711 = vadd.f32 %v1654, %v1694
        %v1712 = vadd.f32 %v1655, %v1696
        %v1713 = vld [vmem:[%s6] sm:$0x1]
        %v1715 = vlaneseq
        %v1716 = vshrl.u32 %v1715, 7
        %v1717 = vsub.s32 0, %v1716
        %v1718 = vrot.slane %v1713, %v1717
        %1719 = vrot.lane.b32.xlu0 %v1718, 64
        %v1720 = vpop.permute.xlu0 %1719
        %v1722 = vadd.f32 %v1705, %v1720
        %v1723 = vadd.f32 %v1706, %v1720
        %v1724 = vadd.f32 %v1707, %v1720
        %v1725 = vadd.f32 %v1708, %v1720
        %v1726 = vadd.f32 %v1709, %v1720
        %v1727 = vadd.f32 %v1710, %v1720
        %v1728 = vadd.f32 %v1711, %v1720
        %v1729 = vadd.f32 %v1712, %v1720
        %1738 = vrot.lane.b32.xlu0 %v1722, 64
        %v1739 = vpop.permute.xlu0 %1738
        %1740 = vrot.lane.b32.xlu0 %v1723, 64
        %v1741 = vpop.permute.xlu0 %1740
        %1742 = vrot.lane.b32.xlu0 %v1724, 64
        %v1743 = vpop.permute.xlu0 %1742
        %1744 = vrot.lane.b32.xlu0 %v1725, 64
        %v1745 = vpop.permute.xlu0 %1744
        %1746 = vrot.lane.b32.xlu0 %v1726, 64
        %v1747 = vpop.permute.xlu0 %1746
        %1748 = vrot.lane.b32.xlu0 %v1727, 64
        %v1749 = vpop.permute.xlu0 %1748
        %1750 = vrot.lane.b32.xlu0 %v1728, 64
        %v1751 = vpop.permute.xlu0 %1750
        %1752 = vrot.lane.b32.xlu0 %v1729, 64
        %v1753 = vpop.permute.xlu0 %1752
        %v1762 = vadd.f32 %v1133, %v1739
        %v1763 = vadd.f32 %v1134, %v1741
        %v1764 = vadd.f32 %v1135, %v1743
        %v1765 = vadd.f32 %v1136, %v1745
        %v1766 = vadd.f32 %v1137, %v1747
        %v1767 = vadd.f32 %v1138, %v1749
        %v1768 = vadd.f32 %v1139, %v1751
        %v1769 = vadd.f32 %v1140, %v1753
        %v1770 = vpack.c.bf16 %v1763, %v1762
        %v1771 = vpack.c.bf16 %v1765, %v1764
        %v1772 = vpack.c.bf16 %v1767, %v1766
        %v1773 = vpack.c.bf16 %v1769, %v1768
        %v1774 = vld [vmem:[%s7] sm:$0xf]
        %v1775 = vld [vmem:[%s7 + $0x4] sm:$0xf]
        %v1776 = vld [vmem:[%s7 + $0x8] sm:$0xf]
        %v1777 = vld [vmem:[%s7 + $0xc] sm:$0xf]
        %v1778 = vld [vmem:[%s7 + $0x10] sm:$0xf]
        %v1779 = vld [vmem:[%s7 + $0x14] sm:$0xf]
        %v1780 = vld [vmem:[%s7 + $0x18] sm:$0xf]
        %v1781 = vld [vmem:[%s7 + $0x1c] sm:$0xf]
        %v1782 = vld [vmem:[%s8] sm:$0x1]
        %v1784 = vlaneseq
        %v1785 = vshrl.u32 %v1784, 7
        %v1786 = vsub.s32 0, %v1785
        %v1787 = vrot.slane %v1782, %v1786
        %v1797 = vunpack.c.l.b16 %v1774
        %v1798 = vunpack.c.l.b16 %v1775
        %v1799 = vunpack.c.l.b16 %v1776
        %v1800 = vunpack.c.l.b16 %v1777
        %v1801 = vunpack.c.l.b16 %v1778
        %v1802 = vunpack.c.l.b16 %v1779
        %v1803 = vunpack.c.l.b16 %v1780
        %v1804 = vunpack.c.l.b16 %v1781
        %v1805 = vpack.c.b16 %v1798, %v1797
        %v1806 = vpack.c.b16 %v1800, %v1799
        %v1807 = vpack.c.b16 %v1802, %v1801
        %v1808 = vpack.c.b16 %v1804, %v1803
        %v1814 = vsel %vm776, %v1770, 0
        %v1817 = vsel %vm776, %v1771, 0
        %v1820 = vsel %vm776, %v1772, 0
        %v1823 = vsel %vm776, %v1773, 0
        %1825 = vmatprep.subr.bf16.mxu0 0
        %1826 = vmatpush1.bf16.msra.mxu0 0
        %1827 = vmatprep.subr.bf16.mxu0 0
        %1828 = vmatpush1.bf16.msra.mxu0 0
        %1829 = vmatprep.subr.bf16.mxu0 0
        %1830 = vmatpush1.bf16.msra.mxu0 0
        %1831 = vmatprep.subr.bf16.mxu0 0
        %1832 = vmatpush1.bf16.msra.mxu0 0
        %1833 = vmatprep.subr.bf16.mxu0 0
        %1834 = vmatpush1.bf16.msra.mxu0 %v1808
        %1835 = vmatprep.subr.bf16.mxu0 0
        %1836 = vmatpush1.bf16.msra.mxu0 %v1807
        %1837 = vmatprep.subr.bf16.mxu0 0
        %1838 = vmatpush1.bf16.msra.mxu0 %v1806
        %1839 = vmatprep.subr.bf16.mxu0 0
        %1840 = vmatpush1.bf16.msra.mxu0 %v1805
        %1841 = vmatprep.subr.bf16.mxu0 0
        %1842 = vmatpush2.bf16.msra.mxu0 0
        %1843 = vmatprep.subr.bf16.mxu0 0
        %1844 = vmatpush2.bf16.msra.mxu0 0
        %1845 = vmatprep.subr.bf16.mxu0 0
        %1846 = vmatpush2.bf16.msra.mxu0 0
        %1847 = vmatprep.subr.bf16.mxu0 0
        %1848 = vmatpush2.bf16.msra.mxu0 0
        %1849 = vmatprep.subr.bf16.mxu0 0
        %1850 = vmatpush2.bf16.msra.mxu0 0
        %1851 = vmatprep.subr.bf16.mxu0 0
        %1852 = vmatpush2.bf16.msra.mxu0 0
        %1853 = vmatprep.subr.bf16.mxu0 0
        %1854 = vmatpush2.bf16.msra.mxu0 0
        %1855 = vmatprep.subr.bf16.mxu0 0
        %1856 = vmatpush2.bf16.msra.mxu0 0
        %1857 = vmatprep.mubr.bf16.mxu0 0
        %1858 = vmatmul.mubr.bf16.gmra.mxu0 %v1814
        %v1859 = vpop.f32.mrf.mxu0
        %v1860 = vadd.f32 %v1787, %v1859
        %v1861 = vpop.f32.mrf.mxu0
        %v1862 = vpop.f32.mrf.mxu0
        %v1863 = vadd.f32 %v1787, %v1862
        %v1864 = vpop.f32.mrf.mxu0
        %1865 = vmatprep.mubr.bf16.mxu0 0
        %1866 = vmatmul.mubr.bf16.gmra.mxu0 %v1817
        %v1867 = vpop.f32.mrf.mxu0
        %v1868 = vadd.f32 %v1787, %v1867
        %v1869 = vpop.f32.mrf.mxu0
        %v1870 = vpop.f32.mrf.mxu0
        %v1871 = vadd.f32 %v1787, %v1870
        %v1872 = vpop.f32.mrf.mxu0
        %1873 = vmatprep.mubr.bf16.mxu0 0
        %1874 = vmatmul.mubr.bf16.gmra.mxu0 %v1820
        %v1875 = vpop.f32.mrf.mxu0
        %v1876 = vadd.f32 %v1787, %v1875
        %v1877 = vpop.f32.mrf.mxu0
        %v1878 = vpop.f32.mrf.mxu0
        %v1879 = vadd.f32 %v1787, %v1878
        %v1880 = vpop.f32.mrf.mxu0
        %1881 = vmatprep.mubr.bf16.mxu0 0
        %1882 = vmatmul.mubr.bf16.gmra.mxu0 %v1823
        %v1883 = vpop.f32.mrf.mxu0
        %v1884 = vadd.f32 %v1787, %v1883
        %v1885 = vpop.f32.mrf.mxu0
        %v1886 = vpop.f32.mrf.mxu0
        %v1887 = vadd.f32 %v1787, %v1886
        %v1888 = vpop.f32.mrf.mxu0
        %1889 = vdwg.mxu0
        %1898 = vrot.lane.b32.xlu0 %v1860, 64
        %v1899 = vpop.permute.xlu0 %1898
        %1900 = vrot.lane.b32.xlu0 %v1863, 64
        %v1901 = vpop.permute.xlu0 %1900
        %1902 = vrot.lane.b32.xlu0 %v1868, 64
        %v1903 = vpop.permute.xlu0 %1902
        %1904 = vrot.lane.b32.xlu0 %v1871, 64
        %v1905 = vpop.permute.xlu0 %1904
        %1906 = vrot.lane.b32.xlu0 %v1876, 64
        %v1907 = vpop.permute.xlu0 %1906
        %1908 = vrot.lane.b32.xlu0 %v1879, 64
        %v1909 = vpop.permute.xlu0 %1908
        %1910 = vrot.lane.b32.xlu0 %v1884, 64
        %v1911 = vpop.permute.xlu0 %1910
        %1912 = vrot.lane.b32.xlu0 %v1887, 64
        %v1913 = vpop.permute.xlu0 %1912
        %v1922 = vadd.f32 %v713, %v1899
        %v1923 = vadd.f32 %v714, %v1901
        %v1924 = vadd.f32 %v715, %v1903
        %v1925 = vadd.f32 %v716, %v1905
        %v1926 = vadd.f32 %v717, %v1907
        %v1927 = vadd.f32 %v718, %v1909
        %v1928 = vadd.f32 %v719, %v1911
        %v1929 = vadd.f32 %v720, %v1913
        %v1930 = vpack.c.bf16 %v1923, %v1922
        %v1931 = vpack.c.bf16 %v1925, %v1924
        %v1932 = vpack.c.bf16 %v1927, %v1926
        %v1933 = vpack.c.bf16 %v1929, %v1928
        %v1934 = vld [vmem:[%s9] sm:$0xf]
        %v1935 = vld [vmem:[%s9 + $0x4] sm:$0xf]
        %v1936 = vld [vmem:[%s9 + $0x8] sm:$0xf]
        %v1937 = vld [vmem:[%s9 + $0xc] sm:$0xf]
        %v1938 = vld [vmem:[%s9 + $0x10] sm:$0xf]
        %v1939 = vld [vmem:[%s9 + $0x14] sm:$0xf]
        %v1940 = vld [vmem:[%s9 + $0x18] sm:$0xf]
        %v1941 = vld [vmem:[%s9 + $0x1c] sm:$0xf]
        %v1942 = vld [vmem:[%s10] sm:$0x1]
        %v1944 = vlaneseq
        %v1945 = vshrl.u32 %v1944, 7
        %v1946 = vsub.s32 0, %v1945
        %v1947 = vrot.slane %v1942, %v1946
        %1953 = vrot.lane.b32.xlu0 %v1930, 64
        %v1954 = vpop.permute.xlu0 %1953
        %1955 = vrot.lane.b32.xlu0 %v1931, 64
        %v1956 = vpop.permute.xlu0 %1955
        %1957 = vrot.lane.b32.xlu0 %v1932, 64
        %v1958 = vpop.permute.xlu0 %1957
        %1959 = vrot.lane.b32.xlu0 %v1933, 64
        %v1960 = vpop.permute.xlu0 %1959
        %v1969 = vunpack.c.l.b16 %v1934
        %v1970 = vunpack.c.l.b16 %v1935
        %v1971 = vunpack.c.l.b16 %v1936
        %v1972 = vunpack.c.l.b16 %v1937
        %v1973 = vunpack.c.l.b16 %v1938
        %v1974 = vunpack.c.l.b16 %v1939
        %v1975 = vunpack.c.l.b16 %v1940
        %v1976 = vunpack.c.l.b16 %v1941
        %v1977 = vpack.c.b16 %v1970, %v1969
        %v1978 = vpack.c.b16 %v1972, %v1971
        %v1979 = vpack.c.b16 %v1974, %v1973
        %v1980 = vpack.c.b16 %v1976, %v1975
        %v1986 = vsel %vm776, %v1954, 0
        %v1989 = vsel %vm776, %v1956, 0
        %v1992 = vsel %vm776, %v1958, 0
        %v1995 = vsel %vm776, %v1960, 0
        %1997 = vmatprep.subr.bf16.mxu0 0
        %1998 = vmatpush1.bf16.msra.mxu0 0
        %1999 = vmatprep.subr.bf16.mxu0 0
        %2000 = vmatpush1.bf16.msra.mxu0 0
        %2001 = vmatprep.subr.bf16.mxu0 0
        %2002 = vmatpush1.bf16.msra.mxu0 0
        %2003 = vmatprep.subr.bf16.mxu0 0
        %2004 = vmatpush1.bf16.msra.mxu0 0
        %2005 = vmatprep.subr.bf16.mxu0 0
        %2006 = vmatpush1.bf16.msra.mxu0 %v1980
        %2007 = vmatprep.subr.bf16.mxu0 0
        %2008 = vmatpush1.bf16.msra.mxu0 %v1979
        %2009 = vmatprep.subr.bf16.mxu0 0
        %2010 = vmatpush1.bf16.msra.mxu0 %v1978
        %2011 = vmatprep.subr.bf16.mxu0 0
        %2012 = vmatpush1.bf16.msra.mxu0 %v1977
        %2013 = vmatprep.subr.bf16.mxu0 0
        %2014 = vmatpush2.bf16.msra.mxu0 0
        %2015 = vmatprep.subr.bf16.mxu0 0
        %2016 = vmatpush2.bf16.msra.mxu0 0
        %2017 = vmatprep.subr.bf16.mxu0 0
        %2018 = vmatpush2.bf16.msra.mxu0 0
        %2019 = vmatprep.subr.bf16.mxu0 0
        %2020 = vmatpush2.bf16.msra.mxu0 0
        %2021 = vmatprep.subr.bf16.mxu0 0
        %2022 = vmatpush2.bf16.msra.mxu0 0
        %2023 = vmatprep.subr.bf16.mxu0 0
        %2024 = vmatpush2.bf16.msra.mxu0 0
        %2025 = vmatprep.subr.bf16.mxu0 0
        %2026 = vmatpush2.bf16.msra.mxu0 0
        %2027 = vmatprep.subr.bf16.mxu0 0
        %2028 = vmatpush2.bf16.msra.mxu0 0
        %2029 = vmatprep.mubr.bf16.mxu0 0
        %2030 = vmatmul.mubr.bf16.gmra.mxu0 %v1986
        %v2031 = vpop.f32.mrf.mxu0
        %v2032 = vadd.f32 %v1947, %v2031
        %v2033 = vpop.f32.mrf.mxu0
        %v2034 = vpop.f32.mrf.mxu0
        %v2035 = vadd.f32 %v1947, %v2034
        %v2036 = vpop.f32.mrf.mxu0
        %2037 = vmatprep.mubr.bf16.mxu0 0
        %2038 = vmatmul.mubr.bf16.gmra.mxu0 %v1989
        %v2039 = vpop.f32.mrf.mxu0
        %v2040 = vadd.f32 %v1947, %v2039
        %v2041 = vpop.f32.mrf.mxu0
        %v2042 = vpop.f32.mrf.mxu0
        %v2043 = vadd.f32 %v1947, %v2042
        %v2044 = vpop.f32.mrf.mxu0
        %2045 = vmatprep.mubr.bf16.mxu0 0
        %2046 = vmatmul.mubr.bf16.gmra.mxu0 %v1992
        %v2047 = vpop.f32.mrf.mxu0
        %v2048 = vadd.f32 %v1947, %v2047
        %v2049 = vpop.f32.mrf.mxu0
        %v2050 = vpop.f32.mrf.mxu0
        %v2051 = vadd.f32 %v1947, %v2050
        %v2052 = vpop.f32.mrf.mxu0
        %2053 = vmatprep.mubr.bf16.mxu0 0
        %2054 = vmatmul.mubr.bf16.gmra.mxu0 %v1995
        %v2055 = vpop.f32.mrf.mxu0
        %v2056 = vadd.f32 %v1947, %v2055
        %v2057 = vpop.f32.mrf.mxu0
        %v2058 = vpop.f32.mrf.mxu0
        %v2059 = vadd.f32 %v1947, %v2058
        %v2060 = vpop.f32.mrf.mxu0
        %2061 = vdwg.mxu0
        %v2062 = vxor.u32 %v2032, 2147483648
        %v2063 = vxor.u32 %v2035, 2147483648
        %v2064 = vxor.u32 %v2040, 2147483648
        %v2065 = vxor.u32 %v2043, 2147483648
        %v2066 = vxor.u32 %v2048, 2147483648
        %v2067 = vxor.u32 %v2051, 2147483648
        %v2068 = vxor.u32 %v2056, 2147483648
        %v2069 = vxor.u32 %v2059, 2147483648
        %v2070 = vmul.f32 %v2062, 1.442695
        %v2071 = vpow.pop %v2070
        %v2072 = vmul.f32 %v2063, 1.442695
        %v2073 = vpow.pop %v2072
        %v2074 = vmul.f32 %v2064, 1.442695
        %v2075 = vpow.pop %v2074
        %v2076 = vmul.f32 %v2065, 1.442695
        %v2077 = vpow.pop %v2076
        %v2078 = vmul.f32 %v2066, 1.442695
        %v2079 = vpow.pop %v2078
        %v2080 = vmul.f32 %v2067, 1.442695
        %v2081 = vpow.pop %v2080
        %v2082 = vmul.f32 %v2068, 1.442695
        %v2083 = vpow.pop %v2082
        %v2084 = vmul.f32 %v2069, 1.442695
        %v2085 = vpow.pop %v2084
        %v2086 = vadd.f32 %v2071, 1.0
        %v2087 = vadd.f32 %v2073, 1.0
        %v2088 = vadd.f32 %v2075, 1.0
        %v2089 = vadd.f32 %v2077, 1.0
        %v2090 = vadd.f32 %v2079, 1.0
        %v2091 = vadd.f32 %v2081, 1.0
        %v2092 = vadd.f32 %v2083, 1.0
        %v2093 = vadd.f32 %v2085, 1.0
        %v2094 = vrcp.pop %v2086
        %v2095 = vmul.f32 1.0, %v2094
        %v2096 = vrcp.pop %v2087
        %v2097 = vmul.f32 1.0, %v2096
        %v2098 = vrcp.pop %v2088
        %v2099 = vmul.f32 1.0, %v2098
        %v2100 = vrcp.pop %v2089
        %v2101 = vmul.f32 1.0, %v2100
        %v2102 = vrcp.pop %v2090
        %v2103 = vmul.f32 1.0, %v2102
        %v2104 = vrcp.pop %v2091
        %v2105 = vmul.f32 1.0, %v2104
        %v2106 = vrcp.pop %v2092
        %v2107 = vmul.f32 1.0, %v2106
        %v2108 = vrcp.pop %v2093
        %v2109 = vmul.f32 1.0, %v2108
        %v2110 = vmul.f32 %v2032, %v2095
        %v2111 = vmul.f32 %v2035, %v2097
        %v2112 = vmul.f32 %v2040, %v2099
        %v2113 = vmul.f32 %v2043, %v2101
        %v2114 = vmul.f32 %v2048, %v2103
        %v2115 = vmul.f32 %v2051, %v2105
        %v2116 = vmul.f32 %v2056, %v2107
        %v2117 = vmul.f32 %v2059, %v2109
        %v2118 = vpack.c.bf16 %v2111, %v2110
        %v2119 = vpack.c.bf16 %v2113, %v2112
        %v2120 = vpack.c.bf16 %v2115, %v2114
        %v2121 = vpack.c.bf16 %v2117, %v2116
        %v2122 = vld [vmem:[%s11] sm:$0xf]
        %v2123 = vld [vmem:[%s11 + $0x4] sm:$0xf]
        %v2124 = vld [vmem:[%s11 + $0x8] sm:$0xf]
        %v2125 = vld [vmem:[%s11 + $0xc] sm:$0xf]
        %v2126 = vld [vmem:[%s11 + $0x10] sm:$0xf]
        %v2127 = vld [vmem:[%s11 + $0x14] sm:$0xf]
        %v2128 = vld [vmem:[%s11 + $0x18] sm:$0xf]
        %v2129 = vld [vmem:[%s11 + $0x1c] sm:$0xf]
        %v2130 = vld [vmem:[%s11 + $0x20] sm:$0xf]
        %v2131 = vld [vmem:[%s11 + $0x24] sm:$0xf]
        %v2132 = vld [vmem:[%s11 + $0x28] sm:$0xf]
        %v2133 = vld [vmem:[%s11 + $0x2c] sm:$0xf]
        %v2134 = vld [vmem:[%s11 + $0x30] sm:$0xf]
        %v2135 = vld [vmem:[%s11 + $0x34] sm:$0xf]
        %v2136 = vld [vmem:[%s11 + $0x38] sm:$0xf]
        %v2137 = vld [vmem:[%s11 + $0x3c] sm:$0xf]
        %v2138 = vld [vmem:[%s12] sm:$0x1]
        %v2140 = vlaneseq
        %v2141 = vshrl.u32 %v2140, 7
        %v2142 = vsub.s32 0, %v2141
        %v2143 = vrot.slane %v2138, %v2142
        %v2161 = vunpack.c.l.b16 %v2122
        %v2162 = vunpack.c.l.b16 %v2123
        %v2163 = vunpack.c.l.b16 %v2124
        %v2164 = vunpack.c.l.b16 %v2125
        %v2165 = vunpack.c.l.b16 %v2126
        %v2166 = vunpack.c.l.b16 %v2127
        %v2167 = vunpack.c.l.b16 %v2128
        %v2168 = vunpack.c.l.b16 %v2129
        %v2169 = vunpack.c.l.b16 %v2130
        %v2170 = vunpack.c.l.b16 %v2131
        %v2171 = vunpack.c.l.b16 %v2132
        %v2172 = vunpack.c.l.b16 %v2133
        %v2173 = vunpack.c.l.b16 %v2134
        %v2174 = vunpack.c.l.b16 %v2135
        %v2175 = vunpack.c.l.b16 %v2136
        %v2176 = vunpack.c.l.b16 %v2137
        %v2177 = vpack.c.b16 %v2162, %v2161
        %v2178 = vpack.c.b16 %v2164, %v2163
        %v2179 = vpack.c.b16 %v2166, %v2165
        %v2180 = vpack.c.b16 %v2168, %v2167
        %v2181 = vpack.c.b16 %v2170, %v2169
        %v2182 = vpack.c.b16 %v2172, %v2171
        %v2183 = vpack.c.b16 %v2174, %v2173
        %v2184 = vpack.c.b16 %v2176, %v2175
        %2193 = vmatprep.subr.bf16.mxu0 0
        %2194 = vmatpush1.bf16.msra.mxu0 %v2184
        %2195 = vmatprep.subr.bf16.mxu0 0
        %2196 = vmatpush1.bf16.msra.mxu0 %v2183
        %2197 = vmatprep.subr.bf16.mxu0 0
        %2198 = vmatpush1.bf16.msra.mxu0 %v2182
        %2199 = vmatprep.subr.bf16.mxu0 0
        %2200 = vmatpush1.bf16.msra.mxu0 %v2181
        %2201 = vmatprep.subr.bf16.mxu0 0
        %2202 = vmatpush1.bf16.msra.mxu0 %v2180
        %2203 = vmatprep.subr.bf16.mxu0 0
        %2204 = vmatpush1.bf16.msra.mxu0 %v2179
        %2205 = vmatprep.subr.bf16.mxu0 0
        %2206 = vmatpush1.bf16.msra.mxu0 %v2178
        %2207 = vmatprep.subr.bf16.mxu0 0
        %2208 = vmatpush1.bf16.msra.mxu0 %v2177
        %2209 = vmatprep.subr.bf16.mxu0 0
        %2210 = vmatpush2.bf16.msra.mxu0 0
        %2211 = vmatprep.subr.bf16.mxu0 0
        %2212 = vmatpush2.bf16.msra.mxu0 0
        %2213 = vmatprep.subr.bf16.mxu0 0
        %2214 = vmatpush2.bf16.msra.mxu0 0
        %2215 = vmatprep.subr.bf16.mxu0 0
        %2216 = vmatpush2.bf16.msra.mxu0 0
        %2217 = vmatprep.subr.bf16.mxu0 0
        %2218 = vmatpush2.bf16.msra.mxu0 0
        %2219 = vmatprep.subr.bf16.mxu0 0
        %2220 = vmatpush2.bf16.msra.mxu0 0
        %2221 = vmatprep.subr.bf16.mxu0 0
        %2222 = vmatpush2.bf16.msra.mxu0 0
        %2223 = vmatprep.subr.bf16.mxu0 0
        %2224 = vmatpush2.bf16.msra.mxu0 0
        %2225 = vmatprep.mubr.bf16.mxu0 0
        %2226 = vmatmul.mubr.bf16.gmra.mxu0 %v2118
        %v2227 = vpop.f32.mrf.mxu0
        %v2228 = vadd.f32 %v2143, %v2227
        %v2229 = vpop.f32.mrf.mxu0
        %v2230 = vpop.f32.mrf.mxu0
        %v2231 = vadd.f32 %v2143, %v2230
        %v2232 = vpop.f32.mrf.mxu0
        %2233 = vmatprep.mubr.bf16.mxu0 0
        %2234 = vmatmul.mubr.bf16.gmra.mxu0 %v2119
        %v2235 = vpop.f32.mrf.mxu0
        %v2236 = vadd.f32 %v2143, %v2235
        %v2237 = vpop.f32.mrf.mxu0
        %v2238 = vpop.f32.mrf.mxu0
        %v2239 = vadd.f32 %v2143, %v2238
        %v2240 = vpop.f32.mrf.mxu0
        %2241 = vmatprep.mubr.bf16.mxu0 0
        %2242 = vmatmul.mubr.bf16.gmra.mxu0 %v2120
        %v2243 = vpop.f32.mrf.mxu0
        %v2244 = vadd.f32 %v2143, %v2243
        %v2245 = vpop.f32.mrf.mxu0
        %v2246 = vpop.f32.mrf.mxu0
        %v2247 = vadd.f32 %v2143, %v2246
        %v2248 = vpop.f32.mrf.mxu0
        %2249 = vmatprep.mubr.bf16.mxu0 0
        %2250 = vmatmul.mubr.bf16.gmra.mxu0 %v2121
        %v2251 = vpop.f32.mrf.mxu0
        %v2252 = vadd.f32 %v2143, %v2251
        %v2253 = vpop.f32.mrf.mxu0
        %v2254 = vpop.f32.mrf.mxu0
        %v2255 = vadd.f32 %v2143, %v2254
        %v2256 = vpop.f32.mrf.mxu0
        %2257 = vdwg.mxu0
        %2266 = vrot.lane.b32.xlu0 %v2228, 64
        %v2267 = vpop.permute.xlu0 %2266
        %2268 = vrot.lane.b32.xlu0 %v2231, 64
        %v2269 = vpop.permute.xlu0 %2268
        %2270 = vrot.lane.b32.xlu0 %v2236, 64
        %v2271 = vpop.permute.xlu0 %2270
        %2272 = vrot.lane.b32.xlu0 %v2239, 64
        %v2273 = vpop.permute.xlu0 %2272
        %2274 = vrot.lane.b32.xlu0 %v2244, 64
        %v2275 = vpop.permute.xlu0 %2274
        %2276 = vrot.lane.b32.xlu0 %v2247, 64
        %v2277 = vpop.permute.xlu0 %2276
        %2278 = vrot.lane.b32.xlu0 %v2252, 64
        %v2279 = vpop.permute.xlu0 %2278
        %2280 = vrot.lane.b32.xlu0 %v2255, 64
        %v2281 = vpop.permute.xlu0 %2280
        %v2290 = vadd.f32 %v1922, %v2267
        %v2291 = vadd.f32 %v1923, %v2269
        %v2292 = vadd.f32 %v1924, %v2271
        %v2293 = vadd.f32 %v1925, %v2273
        %v2294 = vadd.f32 %v1926, %v2275
        %v2295 = vadd.f32 %v1927, %v2277
        %v2296 = vadd.f32 %v1928, %v2279
        %v2297 = vadd.f32 %v1929, %v2281
        %v2298 = vpack.c.bf16 %v2291, %v2290
        %v2299 = vpack.c.bf16 %v2293, %v2292
        %v2300 = vpack.c.bf16 %v2295, %v2294
        %v2301 = vpack.c.bf16 %v2297, %v2296
        %v2304 = vsel %vm776, %v721, %v2298
        %v2308 = vsel %vm776, %v722, %v2299
        %v2312 = vsel %vm776, %v723, %v2300
        %v2316 = vsel %vm776, %v724, %v2301
        %v2318 = vld [vmem:[%s13] sm:$0xf]
        %v2319 = vld [vmem:[%s13 + $0x4] sm:$0xf]
        %v2320 = vld [vmem:[%s13 + $0x8] sm:$0xf]
        %v2321 = vld [vmem:[%s13 + $0xc] sm:$0xf]
        %v2322 = vld [vmem:[%s13 + $0x10] sm:$0xf]
        %v2323 = vld [vmem:[%s13 + $0x14] sm:$0xf]
        %v2324 = vld [vmem:[%s13 + $0x18] sm:$0xf]
        %v2325 = vld [vmem:[%s13 + $0x1c] sm:$0xf]
        %v2326 = vld [vmem:[%s13 + $0x20] sm:$0xf]
        %v2327 = vld [vmem:[%s13 + $0x24] sm:$0xf]
        %v2328 = vld [vmem:[%s13 + $0x28] sm:$0xf]
        %v2329 = vld [vmem:[%s13 + $0x2c] sm:$0xf]
        %v2330 = vld [vmem:[%s13 + $0x30] sm:$0xf]
        %v2331 = vld [vmem:[%s13 + $0x34] sm:$0xf]
        %v2332 = vld [vmem:[%s13 + $0x38] sm:$0xf]
        %v2333 = vld [vmem:[%s13 + $0x3c] sm:$0xf]
        %v2334 = vld [vmem:[%s14] sm:$0x1]
        %v2336 = vlaneseq
        %v2337 = vshrl.u32 %v2336, 7
        %v2338 = vsub.s32 0, %v2337
        %v2339 = vrot.slane %v2334, %v2338
        %v2357 = vunpack.c.l.b16 %v2318
        %v2358 = vunpack.c.l.b16 %v2319
        %v2359 = vunpack.c.l.b16 %v2320
        %v2360 = vunpack.c.l.b16 %v2321
        %v2361 = vunpack.c.l.b16 %v2322
        %v2362 = vunpack.c.l.b16 %v2323
        %v2363 = vunpack.c.l.b16 %v2324
        %v2364 = vunpack.c.l.b16 %v2325
        %v2365 = vunpack.c.l.b16 %v2326
        %v2366 = vunpack.c.l.b16 %v2327
        %v2367 = vunpack.c.l.b16 %v2328
        %v2368 = vunpack.c.l.b16 %v2329
        %v2369 = vunpack.c.l.b16 %v2330
        %v2370 = vunpack.c.l.b16 %v2331
        %v2371 = vunpack.c.l.b16 %v2332
        %v2372 = vunpack.c.l.b16 %v2333
        %v2373 = vpack.c.b16 %v2358, %v2357
        %v2374 = vpack.c.b16 %v2360, %v2359
        %v2375 = vpack.c.b16 %v2362, %v2361
        %v2376 = vpack.c.b16 %v2364, %v2363
        %v2377 = vpack.c.b16 %v2366, %v2365
        %v2378 = vpack.c.b16 %v2368, %v2367
        %v2379 = vpack.c.b16 %v2370, %v2369
        %v2380 = vpack.c.b16 %v2372, %v2371
        %2389 = vmatprep.subr.bf16.mxu0 0
        %2390 = vmatpush1.bf16.msra.mxu0 %v2380
        %2391 = vmatprep.subr.bf16.mxu0 0
        %2392 = vmatpush1.bf16.msra.mxu0 %v2379
        %2393 = vmatprep.subr.bf16.mxu0 0
        %2394 = vmatpush1.bf16.msra.mxu0 %v2378
        %2395 = vmatprep.subr.bf16.mxu0 0
        %2396 = vmatpush1.bf16.msra.mxu0 %v2377
        %2397 = vmatprep.subr.bf16.mxu0 0
        %2398 = vmatpush1.bf16.msra.mxu0 %v2376
        %2399 = vmatprep.subr.bf16.mxu0 0
        %2400 = vmatpush1.bf16.msra.mxu0 %v2375
        %2401 = vmatprep.subr.bf16.mxu0 0
        %2402 = vmatpush1.bf16.msra.mxu0 %v2374
        %2403 = vmatprep.subr.bf16.mxu0 0
        %2404 = vmatpush1.bf16.msra.mxu0 %v2373
        %2405 = vmatprep.subr.bf16.mxu0 0
        %2406 = vmatpush2.bf16.msra.mxu0 0
        %2407 = vmatprep.subr.bf16.mxu0 0
        %2408 = vmatpush2.bf16.msra.mxu0 0
        %2409 = vmatprep.subr.bf16.mxu0 0
        %2410 = vmatpush2.bf16.msra.mxu0 0
        %2411 = vmatprep.subr.bf16.mxu0 0
        %2412 = vmatpush2.bf16.msra.mxu0 0
        %2413 = vmatprep.subr.bf16.mxu0 0
        %2414 = vmatpush2.bf16.msra.mxu0 0
        %2415 = vmatprep.subr.bf16.mxu0 0
        %2416 = vmatpush2.bf16.msra.mxu0 0
        %2417 = vmatprep.subr.bf16.mxu0 0
        %2418 = vmatpush2.bf16.msra.mxu0 0
        %2419 = vmatprep.subr.bf16.mxu0 0
        %2420 = vmatpush2.bf16.msra.mxu0 0
        %2421 = vmatprep.mubr.bf16.mxu0 0
        %2422 = vmatmul.mubr.bf16.gmra.mxu0 %v2304
        %v2423 = vpop.f32.mrf.mxu0
        %v2424 = vadd.f32 %v2339, %v2423
        %v2425 = vpop.f32.mrf.mxu0
        %v2426 = vpop.f32.mrf.mxu0
        %v2427 = vadd.f32 %v2339, %v2426
        %v2428 = vpop.f32.mrf.mxu0
        %2429 = vmatprep.mubr.bf16.mxu0 0
        %2430 = vmatmul.mubr.bf16.gmra.mxu0 %v2308
        %v2431 = vpop.f32.mrf.mxu0
        %v2432 = vadd.f32 %v2339, %v2431
        %v2433 = vpop.f32.mrf.mxu0
        %v2434 = vpop.f32.mrf.mxu0
        %v2435 = vadd.f32 %v2339, %v2434
        %v2436 = vpop.f32.mrf.mxu0
        %2437 = vmatprep.mubr.bf16.mxu0 0
        %2438 = vmatmul.mubr.bf16.gmra.mxu0 %v2312
        %v2439 = vpop.f32.mrf.mxu0
        %v2440 = vadd.f32 %v2339, %v2439
        %v2441 = vpop.f32.mrf.mxu0
        %v2442 = vpop.f32.mrf.mxu0
        %v2443 = vadd.f32 %v2339, %v2442
        %v2444 = vpop.f32.mrf.mxu0
        %2445 = vmatprep.mubr.bf16.mxu0 0
        %2446 = vmatmul.mubr.bf16.gmra.mxu0 %v2316
        %v2447 = vpop.f32.mrf.mxu0
        %v2448 = vadd.f32 %v2339, %v2447
        %v2449 = vpop.f32.mrf.mxu0
        %v2450 = vpop.f32.mrf.mxu0
        %v2451 = vadd.f32 %v2339, %v2450
        %v2452 = vpop.f32.mrf.mxu0
        %2453 = vdwg.mxu0
        %v2454 = vxor.u32 %v2424, 2147483648
        %v2455 = vxor.u32 %v2427, 2147483648
        %v2456 = vxor.u32 %v2432, 2147483648
        %v2457 = vxor.u32 %v2435, 2147483648
        %v2458 = vxor.u32 %v2440, 2147483648
        %v2459 = vxor.u32 %v2443, 2147483648
        %v2460 = vxor.u32 %v2448, 2147483648
        %v2461 = vxor.u32 %v2451, 2147483648
        %v2462 = vmul.f32 %v2454, 1.442695
        %v2463 = vpow.pop %v2462
        %v2464 = vmul.f32 %v2455, 1.442695
        %v2465 = vpow.pop %v2464
        %v2466 = vmul.f32 %v2456, 1.442695
        %v2467 = vpow.pop %v2466
        %v2468 = vmul.f32 %v2457, 1.442695
        %v2469 = vpow.pop %v2468
        %v2470 = vmul.f32 %v2458, 1.442695
        %v2471 = vpow.pop %v2470
        %v2472 = vmul.f32 %v2459, 1.442695
        %v2473 = vpow.pop %v2472
        %v2474 = vmul.f32 %v2460, 1.442695
        %v2475 = vpow.pop %v2474
        %v2476 = vmul.f32 %v2461, 1.442695
        %v2477 = vpow.pop %v2476
        %v2478 = vadd.f32 %v2463, 1.0
        %v2479 = vadd.f32 %v2465, 1.0
        %v2480 = vadd.f32 %v2467, 1.0
        %v2481 = vadd.f32 %v2469, 1.0
        %v2482 = vadd.f32 %v2471, 1.0
        %v2483 = vadd.f32 %v2473, 1.0
        %v2484 = vadd.f32 %v2475, 1.0
        %v2485 = vadd.f32 %v2477, 1.0
        %v2486 = vrcp.pop %v2478
        %v2487 = vmul.f32 1.0, %v2486
        %v2488 = vrcp.pop %v2479
        %v2489 = vmul.f32 1.0, %v2488
        %v2490 = vrcp.pop %v2480
        %v2491 = vmul.f32 1.0, %v2490
        %v2492 = vrcp.pop %v2481
        %v2493 = vmul.f32 1.0, %v2492
        %v2494 = vrcp.pop %v2482
        %v2495 = vmul.f32 1.0, %v2494
        %v2496 = vrcp.pop %v2483
        %v2497 = vmul.f32 1.0, %v2496
        %v2498 = vrcp.pop %v2484
        %v2499 = vmul.f32 1.0, %v2498
        %v2500 = vrcp.pop %v2485
        %v2501 = vmul.f32 1.0, %v2500
        %v2502 = vmul.f32 %v2424, %v2487
        %v2503 = vmul.f32 %v2427, %v2489
        %v2504 = vmul.f32 %v2432, %v2491
        %v2505 = vmul.f32 %v2435, %v2493
        %v2506 = vmul.f32 %v2440, %v2495
        %v2507 = vmul.f32 %v2443, %v2497
        %v2508 = vmul.f32 %v2448, %v2499
        %v2509 = vmul.f32 %v2451, %v2501
        %2510 = vst [vmem:[%s488] sm:$0xff] %v2502
        %2511 = vst [vmem:[%s488 + $0x8] sm:$0xff] %v2503
        %2512 = vst [vmem:[%s488 + $0x10] sm:$0xff] %v2504
        %2513 = vst [vmem:[%s488 + $0x18] sm:$0xff] %v2505
        %2514 = vst [vmem:[%s488 + $0x20] sm:$0xff] %v2506
        %2515 = vst [vmem:[%s488 + $0x28] sm:$0xff] %v2507
        %2516 = vst [vmem:[%s488 + $0x30] sm:$0xff] %v2508
        %2517 = vst [vmem:[%s488 + $0x38] sm:$0xff] %v2509
        %s2518 = sand.u32 %s357, 1
        %s2519 = scalar_lea.sflag [#allocation3], %s2518
        %s2520 = sand.u32 %s357, 1
        %s2521 = smul.addr %s2520, 64
        %s2522 = scalar_lea.vmem [#allocation2], %s2521
        // Predicated region
        $region81: #{cct_forward.1} parent=79 // pred_check
          %p2523 = pneg %p367
        $region82: #{cct_forward.1} parent=79 // pred_check_branch
          %2525 = sbr.rel (%p2523) target = $region84
        $region83: #{cct_forward.1} parent=79 // pred_region
          %s2526 = smul.u32 8, %s29
          %s2528 = ssub.s32 1024, 1024
          %2529 = vsyncadd %s2519, %s2528
          %s2530 = smul.addr %s2526, 128
          %s2531 = scalar_lea.hbm %s15, %s2530
          %s2532 = sshll.u32 %s2522, 4
          %s2533 = int_to_ptr.vmem [resolvable:$true] %s2532
          %2538 = dma.vmem_to_hbm [thread:$0]  %s2533, 1024, %s2531, %s2519, 128, 128, 8
        $region84: #{cct_forward.1} parent=79 // pred_fallthru
          _
      $region80: #{cct_forward.1} parent=5 // pred_fallthru
        _
      %p2539 = scmp.le.s32.totalorder 2, %s24
      // Predicated region
      $region85: #{cct_forward.1} parent=5 // pred_check
        %p2540 = pneg %p2539
      $region86: #{cct_forward.1} parent=5 // pred_check_branch
        %2542 = sbr.rel (%p2540) target = $region88
      $region87: #{cct_forward.1} parent=5 // pred_region
        %s2543 = ssub.s32 %s24, 2
        // Predicated region
        $region89: #{cct_forward.1} parent=87 // pred_check
          %p2544 = pneg %p373
        $region90: #{cct_forward.1} parent=87 // pred_check_branch
          %2546 = sbr.rel (%p2544) target = $region92
        $region91: #{cct_forward.1} parent=87 // pred_region
          %s2547 = sand.u32 %s358, 1
          %s2548 = scalar_lea.sflag [#allocation3], %s2547
          %s2549 = sand.u32 %s358, 1
          %s2550 = smul.addr %s2549, 64
          %s2551 = scalar_lea.vmem [#allocation2], %s2550
          %2552 = dma.done %s2548, 1024
        $region92: #{cct_forward.1} parent=87 // pred_fallthru
          _
      $region88: #{cct_forward.1} parent=5 // pred_fallthru
        _
    $region6: #{cct_forward.1} parent=1 // loop_footer
      %s28 = sadd.s32 1, %s24
    $region7: #{cct_forward.1} parent=1 // loop_footer_branch
      %23 = sbr.rel target = $region3
    $region8: #{cct_forward.1} parent=1 // loop_exit
      _
    %2553 = vsyncpa [#allocation3], 1
    %s2554 = scalar_lea.sflag [#allocation3], 1
    %2555 = vsyncpa %s2554, 1

</llo_original>
